<compile_context>
chip_gen: v7x
topology: tpu7x:2x2x1
jax: 0.10.0
libtpu: 0.0.40
codegen_flags: <defaults>
</compile_context>

<pallas_src>
import functools

import jax
import jax.numpy as jnp
import numpy as np
from jax.experimental import pallas as pl
from jax.experimental.pallas import tpu as pltpu


def _round_up(n, m):
    return ((n + m - 1) // m) * m


def _vmem_limit_bytes():
    """Safe scoped-VMEM limit: derived from the device, with headroom."""
    cap = None
    try:
        info = pltpu.get_tpu_info()
        cap = getattr(info, "vmem_capacity_bytes", None)
    except Exception:
        cap = None
    if not cap:
        cap = 64 * 1024 * 1024            # conservative: v7x physical VMEM
    return int(min(cap - 8 * 1024 * 1024, 100 * 1024 * 1024))


def _buffered_one():
    """pl.Buffered(1) if this JAX supports it, else None (default buffering)."""
    try:
        return pl.Buffered(buffer_count=1)
    except TypeError:
        try:
            return pl.Buffered(1)
        except Exception:
            return None


def _const_spec(shape, pmode):
    """Grid-invariant block: constant index_map, single-buffered if possible."""
    idx = lambda i: (0,) * len(shape)
    if pmode is not None:
        try:
            return pl.BlockSpec(shape, idx, pipeline_mode=pmode)
        except TypeError:
            pass
    return pl.BlockSpec(shape, idx)


def moe3_kernel(x_ref, cwx1_ref, cwx2_ref, cwx3_ref,
                w1_ref, sel1_ref, sb1_ref,
                w2_ref, sel2_ref, sb2_ref,
                w3_ref, b3_ref, sel3_ref,
                o_ref):
    """One token tile through all three fused-expert stages.

    x_ref    : (tm, H)              token tile (mxu dtype)
    cwxk_ref : (tm, E_k*R_k)        pre-expanded routing weights (f32)
    wk_ref   : (in_k, E_k*R_k)      fused expert weights (expert-major lanes)
    selk_ref : (E_k*R_k, R_k)       0/1 expert-group reduction selector (f32)
    sbk_ref  : (E_k*R_k, R_k)       selector scaled by the bias (stages 1, 2)
    b3_ref   : (1, E3*O)            stage-3 bias row (added pre-relu)
    o_ref    : (tm, O)              output tile
    """
    mxu_dtype = x_ref.dtype

    def stage(inp, w_ref, cwx_ref, sel_ref, selb_ref):
        # One MXU matmul covering every expert of this stage (N = E*R).
        h = jnp.dot(inp, w_ref[...], preferred_element_type=jnp.float32)
        cwx = cwx_ref[...]
        # Lane-aligned routing weighting (VPU), expert-group reduction on the
        # MXU via the 0/1 selector; bias folded in as cwx @ Sb
        # (sum_e cw_e*(x@W_e + b_e) == (cwx*h)@S + cwx@Sb).
        out = jnp.dot(cwx * h, sel_ref[...], preferred_element_type=jnp.float32)
        out = out + jnp.dot(cwx, selb_ref[...],
                            preferred_element_type=jnp.float32)
        return out                                      # f32 (tm, R_k) carry

    s1 = stage(x_ref[...], w1_ref, cwx1_ref, sel1_ref, sb1_ref)
    s2 = stage(s1.astype(mxu_dtype), w2_ref, cwx2_ref, sel2_ref, sb2_ref)

    # Stage 3: per-expert relu happens BEFORE the routed combine, so the bias
    # cannot be folded; add it pre-relu on the (tm, E3*O) intermediate.
    h3 = jnp.dot(s2.astype(mxu_dtype), w3_ref[...],
                 preferred_element_type=jnp.float32)
    h3 = jnp.maximum(h3 + b3_ref[...], 0.0)
    s3 = jnp.dot(cwx3_ref[...] * h3, sel3_ref[...],
                 preferred_element_type=jnp.float32)
    o_ref[...] = jnp.maximum(s3, 0.0).astype(o_ref.dtype)


def combined_weights(expert_mask, routing_weights):
    # expert_mask: (E, top_k, T) one-hot; routing_weights: (T, top_k)
    # -> (T, E) per-token per-expert effective routing weight, always in f32.
    return jnp.einsum("ekt,tk->te",
                      expert_mask.astype(jnp.float32),
                      routing_weights.astype(jnp.float32))


def _selector(num_e, r, bias=None):
    """(E*r, r) stacked-identity selector; optionally scaled by the bias."""
    s = jnp.tile(jnp.eye(r, dtype=jnp.float32), (num_e, 1))
    if bias is not None:
        s = s * bias.reshape(num_e * r, 1).astype(jnp.float32)
    return s


@functools.partial(jax.jit, static_argnames=("tm", "mxu_dtype"))
def moe3_forward(x, expert_mask1, expert_mask2, expert_mask3,
                 rw1, rw2, rw3, params, tm=512, mxu_dtype=None):
    w1, b1, w2, b2, w3, b3 = params          # wk: (E, in, out), bk: (E, 1, out)
    B, S, H = x.shape
    T = B * S
    E1, _, R0 = w1.shape
    E2, _, R1 = w2.shape
    E3, _, O = w3.shape

    if mxu_dtype is None:
        mxu_dtype = x.dtype
    mxu_dtype = jnp.dtype(mxu_dtype)

    # Combined routing weights in f32, expanded to E*R lanes so the in-kernel
    # combine is a lane-aligned multiply (no 16-lane slices / lane broadcasts).
    cw1 = combined_weights(expert_mask1, rw1)
    cw2 = combined_weights(expert_mask2, rw2)
    cw3 = combined_weights(expert_mask3, rw3)
    cwx1 = jnp.repeat(cw1, R0, axis=1)                    # (T, E1*R0)
    cwx2 = jnp.repeat(cw2, R1, axis=1)                    # (T, E2*R1)
    cwx3 = jnp.repeat(cw3, O, axis=1)                     # (T, E3*O)

    # Fused expert weights: (E, in, out) -> (in, E*out), expert-major lanes.
    w1f = jnp.transpose(w1, (1, 0, 2)).reshape(H, E1 * R0).astype(mxu_dtype)
    w2f = jnp.transpose(w2, (1, 0, 2)).reshape(R0, E2 * R1).astype(mxu_dtype)
    w3f = jnp.transpose(w3, (1, 0, 2)).reshape(R1, E3 * O).astype(mxu_dtype)

    # Expert-group reduction selectors (0/1) + bias-folded selectors (f32).
    sel1, sb1 = _selector(E1, R0), _selector(E1, R0, b1)
    sel2, sb2 = _selector(E2, R1), _selector(E2, R1, b2)
    sel3 = _selector(E3, O)
    b3row = b3.reshape(1, E3 * O).astype(jnp.float32)

    x2 = x.reshape(T, H).astype(mxu_dtype)

    # Token tiling: dtype-aware sublane multiple; cap so the grid has >= 2
    # steps whenever possible (keeps both v7x TensorCores busy).
    sub = {4: 8, 2: 16, 1: 32}.get(mxu_dtype.itemsize, 8)
    tm = max(sub, _round_up(int(tm), sub))
    tm = min(tm, max(sub, _round_up((T + 1) // 2, sub)))
    T_pad = _round_up(T, tm)
    if T_pad != T:
        pad = T_pad - T
        # Padded rows get cwx == 0 -> contribute exactly zero; sliced off below.
        x2 = jnp.pad(x2, ((0, pad), (0, 0)))
        cwx1 = jnp.pad(cwx1, ((0, pad), (0, 0)))
        cwx2 = jnp.pad(cwx2, ((0, pad), (0, 0)))
        cwx3 = jnp.pad(cwx3, ((0, pad), (0, 0)))

    pmode = _buffered_one()
    grid = (T_pad // tm,)

    out = pl.pallas_call(
        moe3_kernel,
        out_shape=jax.ShapeDtypeStruct((T_pad, O), x.dtype),
        grid_spec=pltpu.PrefetchScalarGridSpec(
            num_scalar_prefetch=0,
            grid=grid,
            in_specs=[
                pl.BlockSpec((tm, H), lambda i: (i, 0)),
                pl.BlockSpec((tm, E1 * R0), lambda i: (i, 0)),
                pl.BlockSpec((tm, E2 * R1), lambda i: (i, 0)),
                pl.BlockSpec((tm, E3 * O), lambda i: (i, 0)),
                # Grid-invariant fused weights / selectors / biases
                # (constant block index, single-buffered when supported).
                _const_spec((H, E1 * R0), pmode),
                _const_spec((E1 * R0, R0), pmode),
                _const_spec((E1 * R0, R0), pmode),
                _const_spec((R0, E2 * R1), pmode),
                _const_spec((E2 * R1, R1), pmode),
                _const_spec((E2 * R1, R1), pmode),
                _const_spec((R1, E3 * O), pmode),
                _const_spec((1, E3 * O), pmode),
                _const_spec((E3 * O, O), pmode),
            ],
            out_specs=pl.BlockSpec((tm, O), lambda i: (i, 0)),
        ),
        compiler_params=pltpu.CompilerParams(
            dimension_semantics=("parallel",),
            vmem_limit_bytes=_vmem_limit_bytes(),
        ),
    )(x2, cwx1, cwx2, cwx3,
      w1f, sel1, sb1, w2f, sel2, sb2, w3f, b3row, sel3)

    return out[:T].reshape(B, S, O)


def ref_forward(x, m1, m2, m3, rw1, rw2, rw3, params):
    """Pure-JAX reference mirroring the PyTorch per-expert loops (dense form)."""
    w1, b1, w2, b2, w3, b3 = params
    B, S, H = x.shape
    T = B * S
    x2 = x.reshape(T, H).astype(jnp.float32)

    cw1 = combined_weights(m1, rw1)
    cw2 = combined_weights(m2, rw2)
    cw3 = combined_weights(m3, rw3)

    s1 = jnp.zeros((T, w1.shape[2]), jnp.float32)
    for e in range(w1.shape[0]):
        s1 = s1 + cw1[:, e:e + 1] * (x2 @ w1[e] + b1[e, 0])
    s2 = jnp.zeros((T, w2.shape[2]), jnp.float32)
    for e in range(w2.shape[0]):
        s2 = s2 + cw2[:, e:e + 1] * (s1 @ w2[e] + b2[e, 0])
    s3 = jnp.zeros((T, w3.shape[2]), jnp.float32)
    for e in range(w3.shape[0]):
        s3 = s3 + cw3[:, e:e + 1] * jnp.maximum(s2 @ w3[e] + b3[e, 0], 0.0)
    return jnp.maximum(s3, 0.0).reshape(B, S, -1)


def init_linear_stack(key, num_experts, in_dim, out_dim):
    """PyTorch nn.Linear-style init: U(-1/sqrt(in), 1/sqrt(in)), deterministic."""
    kw, kb = jax.random.split(key)
    bound = 1.0 / np.sqrt(in_dim)
    # stored as (E, in, out) == transposed torch weight (out, in)
    w = jax.random.uniform(kw, (num_experts, in_dim, out_dim),
                           jnp.float32, -bound, bound)
    b = jax.random.uniform(kb, (num_experts, 1, out_dim),
                           jnp.float32, -bound, bound)
    return w, b


def make_routing(key, T, num_experts, top_k):
    logits = jax.random.normal(key, (T, num_experts), jnp.float32)
    probs = jax.nn.softmax(logits, axis=-1)
    rw, sel = jax.lax.top_k(probs, top_k)                     # (T, k), (T, k)
    # expert_mask: (E, top_k, T) -- same as F.one_hot(sel, E).permute(2, 1, 0)
    mask = jax.nn.one_hot(sel, num_experts, dtype=jnp.int32)  # (T, k, E)
    mask = jnp.transpose(mask, (2, 1, 0))
    return mask, rw


if __name__ == "__main__":
    # Small, module-consistent shapes (T = 22 is intentionally NOT a multiple
    # of the token tile so the tail-handling path is exercised; the tm cap
    # forces a 2-step grid, exercising the multi-step path too).
    batch, seq = 2, 11           # T = 22 tokens
    hidden_size = 32
    output_size = 32
    rank0, rank1 = 16, 16
    export_num1 = export_num2 = export_num3 = 4
    top_k = 2

    root = jax.random.PRNGKey(0)
    kx, k1, k2, k3, kr1, kr2, kr3 = jax.random.split(root, 7)

    x = jax.random.normal(kx, (batch, seq, hidden_size), jnp.float32)

    w1, b1 = init_linear_stack(k1, export_num1, hidden_size, rank0)
    w2, b2 = init_linear_stack(k2, export_num2, rank0, rank1)
    w3, b3 = init_linear_stack(k3, export_num3, rank1, output_size)
    params = (w1, b1, w2, b2, w3, b3)

    T = batch * seq
    m1, rw1 = make_routing(kr1, T, export_num1, top_k)
    m2, rw2 = make_routing(kr2, T, export_num2, top_k)
    m3, rw3 = make_routing(kr3, T, export_num3, top_k)

    ref = ref_forward(x, m1, m2, m3, rw1, rw2, rw3, params)

    # Default config (f32 MXU path, 2-step grid with padded tail).
    out = moe3_forward(x, m1, m2, m3, rw1, rw2, rw3, params)
    out = jax.block_until_ready(out)
    np.testing.assert_allclose(np.asarray(out), np.asarray(ref),
                               rtol=3e-5, atol=3e-5)

    # Small-tile config: exercises a longer grid plus the padded tail.
    out_small = moe3_forward(x, m1, m2, m3, rw1, rw2, rw3, params, tm=8)
    out_small = jax.block_until_ready(out_small)
    np.testing.assert_allclose(np.asarray(out_small), np.asarray(ref),
                               rtol=3e-5, atol=3e-5)

    # bf16 MXU operands (f32 accumulation / carry / routing math) -- loose
    # tolerance against the f32 reference.
    out_bf16 = moe3_forward(x, m1, m2, m3, rw1, rw2, rw3, params,
                            mxu_dtype=jnp.bfloat16)
    out_bf16 = jax.block_until_ready(out_bf16)
    np.testing.assert_allclose(np.asarray(out_bf16), np.asarray(ref),
                               rtol=1e-1, atol=1e-1)

    print("KERNEL_OK")
</pallas_src>

<mosaic_0001>
module attributes {stable_mosaic.version = 11 : i64} {
  func.func @moe3_kernel(%arg0: i32, %arg1: memref<16x32xf32, #tpu.memory_space<vmem>>, %arg2: memref<16x64xf32, #tpu.memory_space<vmem>>, %arg3: memref<16x64xf32, #tpu.memory_space<vmem>>, %arg4: memref<16x128xf32, #tpu.memory_space<vmem>>, %arg5: memref<32x64xf32, #tpu.memory_space<vmem>>, %arg6: memref<64x16xf32, #tpu.memory_space<vmem>>, %arg7: memref<64x16xf32, #tpu.memory_space<vmem>>, %arg8: memref<16x64xf32, #tpu.memory_space<vmem>>, %arg9: memref<64x16xf32, #tpu.memory_space<vmem>>, %arg10: memref<64x16xf32, #tpu.memory_space<vmem>>, %arg11: memref<16x128xf32, #tpu.memory_space<vmem>>, %arg12: memref<1x128xf32, #tpu.memory_space<vmem>>, %arg13: memref<128x32xf32, #tpu.memory_space<vmem>>, %arg14: memref<16x32xf32, #tpu.memory_space<vmem>>) attributes {dimension_semantics = [#tpu.dimension_semantics<parallel>], iteration_bounds = array<i64: 2>, scalar_prefetch = 0 : i64, scratch_operands = 0 : i64, tpu.core_type = #tpu.core_type<tc>, window_params = [{transform_indices = @transform_0, window_bounds = array<i64: 16, 32>}, {transform_indices = @transform_1, window_bounds = array<i64: 16, 64>}, {transform_indices = @transform_2, window_bounds = array<i64: 16, 64>}, {transform_indices = @transform_3, window_bounds = array<i64: 16, 128>}, {pipeline_mode = #tpu.pipeline_mode<synchronous>, transform_indices = @transform_4, window_bounds = array<i64: 32, 64>}, {pipeline_mode = #tpu.pipeline_mode<synchronous>, transform_indices = @transform_5, window_bounds = array<i64: 64, 16>}, {pipeline_mode = #tpu.pipeline_mode<synchronous>, transform_indices = @transform_6, window_bounds = array<i64: 64, 16>}, {pipeline_mode = #tpu.pipeline_mode<synchronous>, transform_indices = @transform_7, window_bounds = array<i64: 16, 64>}, {pipeline_mode = #tpu.pipeline_mode<synchronous>, transform_indices = @transform_8, window_bounds = array<i64: 64, 16>}, {pipeline_mode = #tpu.pipeline_mode<synchronous>, transform_indices = @transform_9, window_bounds = array<i64: 64, 16>}, {pipeline_mode = #tpu.pipeline_mode<synchronous>, transform_indices = @transform_10, window_bounds = array<i64: 16, 128>}, {pipeline_mode = #tpu.pipeline_mode<synchronous>, transform_indices = @transform_11, window_bounds = array<i64: 1, 128>}, {pipeline_mode = #tpu.pipeline_mode<synchronous>, transform_indices = @transform_12, window_bounds = array<i64: 128, 32>}, {transform_indices = @transform_13, window_bounds = array<i64: 16, 32>}]} {
    %c0 = arith.constant 0 : index
    %c0_0 = arith.constant 0 : index
    %0 = vector.load %arg1[%c0, %c0_0] : memref<16x32xf32, #tpu.memory_space<vmem>>, vector<16x32xf32>
    %c0_1 = arith.constant 0 : index
    %c0_2 = arith.constant 0 : index
    %1 = vector.load %arg5[%c0_1, %c0_2] : memref<32x64xf32, #tpu.memory_space<vmem>>, vector<32x64xf32>
    %cst = arith.constant dense<0.000000e+00> : vector<16x64xf32>
    %2 = tpu.matmul %0, %1, %cst {dimension_numbers = #tpu.dot_dimension_numbers<[1], [0], [0], [1], [0, 0, 1, 1], [], []>} : vector<16x32xf32>, vector<32x64xf32>, vector<16x64xf32> -> vector<16x64xf32>
    %c0_3 = arith.constant 0 : index
    %c0_4 = arith.constant 0 : index
    %3 = vector.load %arg2[%c0_3, %c0_4] : memref<16x64xf32, #tpu.memory_space<vmem>>, vector<16x64xf32>
    %4 = arith.mulf %3, %2 : vector<16x64xf32>
    %c0_5 = arith.constant 0 : index
    %c0_6 = arith.constant 0 : index
    %5 = vector.load %arg6[%c0_5, %c0_6] : memref<64x16xf32, #tpu.memory_space<vmem>>, vector<64x16xf32>
    %cst_7 = arith.constant dense<0.000000e+00> : vector<16x16xf32>
    %6 = tpu.matmul %4, %5, %cst_7 {dimension_numbers = #tpu.dot_dimension_numbers<[1], [0], [0], [1], [0, 0, 1, 1], [], []>} : vector<16x64xf32>, vector<64x16xf32>, vector<16x16xf32> -> vector<16x16xf32>
    %c0_8 = arith.constant 0 : index
    %c0_9 = arith.constant 0 : index
    %7 = vector.load %arg7[%c0_8, %c0_9] : memref<64x16xf32, #tpu.memory_space<vmem>>, vector<64x16xf32>
    %cst_10 = arith.constant dense<0.000000e+00> : vector<16x16xf32>
    %8 = tpu.matmul %3, %7, %cst_10 {dimension_numbers = #tpu.dot_dimension_numbers<[1], [0], [0], [1], [0, 0, 1, 1], [], []>} : vector<16x64xf32>, vector<64x16xf32>, vector<16x16xf32> -> vector<16x16xf32>
    %9 = arith.addf %6, %8 : vector<16x16xf32>
    %c0_11 = arith.constant 0 : index
    %c0_12 = arith.constant 0 : index
    %10 = vector.load %arg8[%c0_11, %c0_12] : memref<16x64xf32, #tpu.memory_space<vmem>>, vector<16x64xf32>
    %cst_13 = arith.constant dense<0.000000e+00> : vector<16x64xf32>
    %11 = tpu.matmul %9, %10, %cst_13 {dimension_numbers = #tpu.dot_dimension_numbers<[1], [0], [0], [1], [0, 0, 1, 1], [], []>} : vector<16x16xf32>, vector<16x64xf32>, vector<16x64xf32> -> vector<16x64xf32>
    %c0_14 = arith.constant 0 : index
    %c0_15 = arith.constant 0 : index
    %12 = vector.load %arg3[%c0_14, %c0_15] : memref<16x64xf32, #tpu.memory_space<vmem>>, vector<16x64xf32>
    %13 = arith.mulf %12, %11 : vector<16x64xf32>
    %c0_16 = arith.constant 0 : index
    %c0_17 = arith.constant 0 : index
    %14 = vector.load %arg9[%c0_16, %c0_17] : memref<64x16xf32, #tpu.memory_space<vmem>>, vector<64x16xf32>
    %cst_18 = arith.constant dense<0.000000e+00> : vector<16x16xf32>
    %15 = tpu.matmul %13, %14, %cst_18 {dimension_numbers = #tpu.dot_dimension_numbers<[1], [0], [0], [1], [0, 0, 1, 1], [], []>} : vector<16x64xf32>, vector<64x16xf32>, vector<16x16xf32> -> vector<16x16xf32>
    %c0_19 = arith.constant 0 : index
    %c0_20 = arith.constant 0 : index
    %16 = vector.load %arg10[%c0_19, %c0_20] : memref<64x16xf32, #tpu.memory_space<vmem>>, vector<64x16xf32>
    %cst_21 = arith.constant dense<0.000000e+00> : vector<16x16xf32>
    %17 = tpu.matmul %12, %16, %cst_21 {dimension_numbers = #tpu.dot_dimension_numbers<[1], [0], [0], [1], [0, 0, 1, 1], [], []>} : vector<16x64xf32>, vector<64x16xf32>, vector<16x16xf32> -> vector<16x16xf32>
    %18 = arith.addf %15, %17 : vector<16x16xf32>
    %c0_22 = arith.constant 0 : index
    %c0_23 = arith.constant 0 : index
    %19 = vector.load %arg11[%c0_22, %c0_23] : memref<16x128xf32, #tpu.memory_space<vmem>>, vector<16x128xf32>
    %cst_24 = arith.constant dense<0.000000e+00> : vector<16x128xf32>
    %20 = tpu.matmul %18, %19, %cst_24 {dimension_numbers = #tpu.dot_dimension_numbers<[1], [0], [0], [1], [0, 0, 1, 1], [], []>} : vector<16x16xf32>, vector<16x128xf32>, vector<16x128xf32> -> vector<16x128xf32>
    %c0_25 = arith.constant 0 : index
    %c0_26 = arith.constant 0 : index
    %21 = vector.load %arg12[%c0_25, %c0_26] : memref<1x128xf32, #tpu.memory_space<vmem>>, vector<1x128xf32>
    %22 = vector.broadcast %21 : vector<1x128xf32> to vector<16x128xf32>
    %23 = arith.addf %20, %22 : vector<16x128xf32>
    %cst_27 = arith.constant 0.000000e+00 : f32
    %24 = vector.broadcast %cst_27 : f32 to vector<16x128xf32>
    %25 = arith.maximumf %23, %24 : vector<16x128xf32>
    %c0_28 = arith.constant 0 : index
    %c0_29 = arith.constant 0 : index
    %26 = vector.load %arg4[%c0_28, %c0_29] : memref<16x128xf32, #tpu.memory_space<vmem>>, vector<16x128xf32>
    %27 = arith.mulf %26, %25 : vector<16x128xf32>
    %c0_30 = arith.constant 0 : index
    %c0_31 = arith.constant 0 : index
    %28 = vector.load %arg13[%c0_30, %c0_31] : memref<128x32xf32, #tpu.memory_space<vmem>>, vector<128x32xf32>
    %cst_32 = arith.constant dense<0.000000e+00> : vector<16x32xf32>
    %29 = tpu.matmul %27, %28, %cst_32 {dimension_numbers = #tpu.dot_dimension_numbers<[1], [0], [0], [1], [0, 0, 1, 1], [], []>} : vector<16x128xf32>, vector<128x32xf32>, vector<16x32xf32> -> vector<16x32xf32>
    %cst_33 = arith.constant 0.000000e+00 : f32
    %30 = vector.broadcast %cst_33 : f32 to vector<16x32xf32>
    %31 = arith.maximumf %29, %30 : vector<16x32xf32>
    %c0_34 = arith.constant 0 : index
    %c0_35 = arith.constant 0 : index
    %32 = vector.load %arg14[%c0_34, %c0_35] : memref<16x32xf32, #tpu.memory_space<vmem>>, vector<16x32xf32>
    tpu.vector_store %arg14[%c0_34, %c0_35], %31 {strides = array<i32>} : memref<16x32xf32, #tpu.memory_space<vmem>>, vector<16x32xf32>,
    return
  }
  func.func @transform_0(%arg0: i32) -> (i32, i32) {
    %c0_i32 = arith.constant 0 : i32
    %c0_i32_0 = arith.constant 0 : i32
    return %arg0, %c0_i32 : i32, i32
  }
  func.func @transform_1(%arg0: i32) -> (i32, i32) {
    %c0_i32 = arith.constant 0 : i32
    %c0_i32_0 = arith.constant 0 : i32
    return %arg0, %c0_i32 : i32, i32
  }
  func.func @transform_2(%arg0: i32) -> (i32, i32) {
    %c0_i32 = arith.constant 0 : i32
    %c0_i32_0 = arith.constant 0 : i32
    return %arg0, %c0_i32 : i32, i32
  }
  func.func @transform_3(%arg0: i32) -> (i32, i32) {
    %c0_i32 = arith.constant 0 : i32
    %c0_i32_0 = arith.constant 0 : i32
    return %arg0, %c0_i32 : i32, i32
  }
  func.func @transform_4(%arg0: i32) -> (i32, i32) {
    %c0_i32 = arith.constant 0 : i32
    %c0_i32_0 = arith.constant 0 : i32
    %c0_i32_1 = arith.constant 0 : i32
    return %c0_i32, %c0_i32_0 : i32, i32
  }
  func.func @transform_5(%arg0: i32) -> (i32, i32) {
    %c0_i32 = arith.constant 0 : i32
    %c0_i32_0 = arith.constant 0 : i32
    %c0_i32_1 = arith.constant 0 : i32
    return %c0_i32, %c0_i32_0 : i32, i32
  }
  func.func @transform_6(%arg0: i32) -> (i32, i32) {
    %c0_i32 = arith.constant 0 : i32
    %c0_i32_0 = arith.constant 0 : i32
    %c0_i32_1 = arith.constant 0 : i32
    return %c0_i32, %c0_i32_0 : i32, i32
  }
  func.func @transform_7(%arg0: i32) -> (i32, i32) {
    %c0_i32 = arith.constant 0 : i32
    %c0_i32_0 = arith.constant 0 : i32
    %c0_i32_1 = arith.constant 0 : i32
    return %c0_i32, %c0_i32_0 : i32, i32
  }
  func.func @transform_8(%arg0: i32) -> (i32, i32) {
    %c0_i32 = arith.constant 0 : i32
    %c0_i32_0 = arith.constant 0 : i32
    %c0_i32_1 = arith.constant 0 : i32
    return %c0_i32, %c0_i32_0 : i32, i32
  }
  func.func @transform_9(%arg0: i32) -> (i32, i32) {
    %c0_i32 = arith.constant 0 : i32
    %c0_i32_0 = arith.constant 0 : i32
    %c0_i32_1 = arith.constant 0 : i32
    return %c0_i32, %c0_i32_0 : i32, i32
  }
  func.func @transform_10(%arg0: i32) -> (i32, i32) {
    %c0_i32 = arith.constant 0 : i32
    %c0_i32_0 = arith.constant 0 : i32
    %c0_i32_1 = arith.constant 0 : i32
    return %c0_i32, %c0_i32_0 : i32, i32
  }
  func.func @transform_11(%arg0: i32) -> (i32, i32) {
    %c0_i32 = arith.constant 0 : i32
    %c0_i32_0 = arith.constant 0 : i32
    %c0_i32_1 = arith.constant 0 : i32
    return %c0_i32, %c0_i32_0 : i32, i32
  }
  func.func @transform_12(%arg0: i32) -> (i32, i32) {
    %c0_i32 = arith.constant 0 : i32
    %c0_i32_0 = arith.constant 0 : i32
    %c0_i32_1 = arith.constant 0 : i32
    return %c0_i32, %c0_i32_0 : i32, i32
  }
  func.func @transform_13(%arg0: i32) -> (i32, i32) {
    %c0_i32 = arith.constant 0 : i32
    %c0_i32_0 = arith.constant 0 : i32
    return %arg0, %c0_i32 : i32, i32
  }
}

</mosaic_0001>

<llo_original>
// kernel: mul.9
$region0: #{mul.9}
  %s0 = inlined_call_operand.vmem [shape: f32[4,16], index: 0, kind: input, shape index: {}]
  %s1 = inlined_call_operand.vmem [shape: f32[64], index: 1, kind: output, shape index: {}]
  $region1: #{mul.9} parent=0
    #allocation0 [shape = 'u8[4096]{0}', space=vmem, size = 0x1000, scoped, tag = 'scoped mem for output reshape']
    #allocation1 [shape = 'u8[4096]{0}', space=vmem, size = 0x1000, scoped, tag = 'scoped mem for input reshape']
    %s3 = sshllo.u32 0, 4
    %v4 = vld [vmem:[%s0] sm:%s3]
    %5 = vst [vmem:[#allocation1] sm:%s3] %v4
    %v6 = vld [vmem:[#allocation1] sm:$0x1]
    %vm7 = vcmask 130048
    %8 = vst.msk [vmem:[#allocation0] sm:$0x1] %vm7, %v6
    %s9 = scalar_lea.vmem [#allocation1], 3
    %v10 = vld [vmem:[%s9] sm:$0x1]
    %11 = vrot.lane.b32.xlu0 %v10, 48
    %v12 = vpop.permute.xlu0 %11
    %vm13 = vcmask 523648
    %14 = vst.msk [vmem:[#allocation0] sm:$0x1] %vm13, %v12
    %s15 = scalar_lea.vmem [#allocation1], 2
    %v16 = vld [vmem:[%s15] sm:$0x1]
    %17 = vrot.lane.b32.xlu0 %v16, 32
    %v18 = vpop.permute.xlu0 %17
    %vm19 = vcmask 392448
    %20 = vst.msk [vmem:[#allocation0] sm:$0x1] %vm19, %v18
    %s21 = scalar_lea.vmem [#allocation1], 1
    %v22 = vld [vmem:[%s21] sm:$0x1]
    %23 = vrot.lane.b32.xlu0 %v22, 16
    %v24 = vpop.permute.xlu0 %23
    %vm25 = vcmask 261248
    %26 = vst.msk [vmem:[#allocation0] sm:$0x1] %vm25, %v24
    %s28 = sshllo.u32 0, 1
    %v30 = vld [vmem:[#allocation0] sm:%s28]
    %s31 = sshllo.u32 0, 1
    %32 = vst [vmem:[%s1] sm:%s31] %v30

// kernel: moe3_forward.1
$region0: #{moe3_forward.1}
  #allocation0 [shape = 'u32[]', space=smem, size = 0x4, offset = 0x4, fixed_abs, tag = 'smem constant byte address 0x4 - core index']
  #allocation1 [shape = 'u32[144,128]{1,0:T(1,128)}', space=vmem, size = 0x12000, scoped, tag = 'internal scratch']
  %s0 = inlined_call_operand.vmem [shape: f32[32,32], index: 0, kind: input, shape index: {}]
  %s1 = inlined_call_operand.vmem [shape: f32[32,64], index: 1, kind: input, shape index: {}]
  %s2 = inlined_call_operand.vmem [shape: f32[32,64], index: 2, kind: input, shape index: {}]
  %s3 = inlined_call_operand.vmem [shape: f32[32,128], index: 3, kind: input, shape index: {}]
  %s4 = inlined_call_operand.vmem [shape: f32[32,64], index: 4, kind: input, shape index: {}]
  %s5 = inlined_call_operand.vmem [shape: f32[64,16], index: 5, kind: input, shape index: {}, may-alias: {5,8}]
  %s6 = inlined_call_operand.vmem [shape: f32[64,16], index: 6, kind: input, shape index: {}]
  %s7 = inlined_call_operand.vmem [shape: f32[16,64], index: 7, kind: input, shape index: {}]
  %s8 = inlined_call_operand.vmem [shape: f32[64,16], index: 8, kind: input, shape index: {}, may-alias: {5,8}]
  %s9 = inlined_call_operand.vmem [shape: f32[64,16], index: 9, kind: input, shape index: {}]
  %s10 = inlined_call_operand.vmem [shape: f32[16,128], index: 10, kind: input, shape index: {}]
  %s11 = inlined_call_operand.vmem [shape: f32[1,128], index: 11, kind: input, shape index: {}]
  %s12 = inlined_call_operand.vmem [shape: f32[128,32], index: 12, kind: input, shape index: {}]
  %s13 = inlined_call_operand.vmem [shape: f32[32,32], index: 13, kind: output, shape index: {}]
  %s14 = sld [smem:[#allocation0]]
  $region85: #{moe3_forward.1} parent=0
    _
  %s16 = ssub.s32 1, %s14
  %s17 = scalar_select 0, %s16, %s14
  loop: start=0, step=1, limit=4
  $region2: #{moe3_forward.1} parent=0 // loop_pre_header
    _
  $region3: #{moe3_forward.1} parent=0 // loop_header
    %s19 = sphi 0, %s23
    %p20 = scmp.ge.s32.totalorder %s19, 4
    %s29 = sphi 0, %s31
    %s32 = sphi 0, %s29
    %s33 = sphi 0, %s32
    %s49 = sphi 0, %s33
    %s55 = sphi 0, %s57
    %s58 = sphi 0, %s55
    %s59 = sphi 0, %s58
    %s75 = sphi 0, %s59
    %s81 = sphi 0, %s83
    %s84 = sphi 0, %s81
    %s85 = sphi 0, %s84
    %s101 = sphi 0, %s85
    %s107 = sphi 0, %s109
    %s110 = sphi 0, %s107
    %s111 = sphi 0, %s110
    %s127 = sphi 0, %s111
    %s131 = sphi 0, %s131
    %s133 = sphi 0, %s131
    %s134 = sphi 0, %s133
    %s148 = sphi 0, %s134
    %s152 = sphi 0, %s152
    %s154 = sphi 0, %s152
    %s155 = sphi 0, %s154
    %s169 = sphi 0, %s155
    %s173 = sphi 0, %s173
    %s175 = sphi 0, %s173
    %s176 = sphi 0, %s175
    %s190 = sphi 0, %s176
    %s194 = sphi 0, %s194
    %s196 = sphi 0, %s194
    %s197 = sphi 0, %s196
    %s211 = sphi 0, %s197
    %s215 = sphi 0, %s215
    %s217 = sphi 0, %s215
    %s218 = sphi 0, %s217
    %s232 = sphi 0, %s218
    %s236 = sphi 0, %s236
    %s238 = sphi 0, %s236
    %s239 = sphi 0, %s238
    %s253 = sphi 0, %s239
    %s257 = sphi 0, %s257
    %s259 = sphi 0, %s257
    %s260 = sphi 0, %s259
    %s274 = sphi 0, %s260
    %s278 = sphi 0, %s278
    %s280 = sphi 0, %s278
    %s281 = sphi 0, %s280
    %s295 = sphi 0, %s281
    %s299 = sphi 0, %s299
    %s301 = sphi 0, %s299
    %s302 = sphi 0, %s301
    %s316 = sphi 0, %s302
    %s322 = sphi 0, %s324
    %s325 = sphi 0, %s322
    %s326 = sphi 0, %s325
    %s342 = sphi 0, %s326
  $region4: #{moe3_forward.1} parent=0 // loop_header_branch
    %22 = sbr.rel (%p20) target = $region8
  $region5: #{moe3_forward.1} parent=0 // loop_body
    %s24 = ssub.s32 %s19, 1
    %s25 = ssub.s32 %s19, 2
    %s26 = sadd.s32 %s19, 1
    %s27 = ssub.s32 %s19, %s26
    %p28 = scmp.eq.s32.totalorder %s27, 0
    %s30 = sadd.s32 %s29, 1
    %s31 = scalar_select %p28, %s29, %s30
    %p34 = pneg %p28
    %p35 = scmp.eq.s32.totalorder %s19, 1
    %p36 = por %p34, %p35
    %p37 = scmp.ne.s32.totalorder %s29, %s32
    %p38 = scmp.eq.s32.totalorder %s19, 0
    %p39 = por %p37, %p38
    %p40 = scmp.ne.s32.totalorder %s29, %s32
    %p41 = scmp.eq.s32.totalorder %s24, 1
    %p42 = por %p40, %p41
    %p43 = scmp.ne.s32.totalorder %s32, %s33
    %p44 = scmp.eq.s32.totalorder %s24, 0
    %p45 = por %p43, %p44
    %p46 = scmp.ne.s32.totalorder %s32, %s33
    %p47 = scmp.eq.s32.totalorder %s25, 1
    %p48 = por %p46, %p47
    %p50 = scmp.ne.s32.totalorder %s33, %s49
    %p51 = scmp.eq.s32.totalorder %s25, 0
    %p52 = por %p50, %p51
    %s53 = ssub.s32 %s19, %s26
    %p54 = scmp.eq.s32.totalorder %s53, 0
    %s56 = sadd.s32 %s55, 1
    %s57 = scalar_select %p54, %s55, %s56
    %p60 = pneg %p54
    %p61 = scmp.eq.s32.totalorder %s19, 1
    %p62 = por %p60, %p61
    %p63 = scmp.ne.s32.totalorder %s55, %s58
    %p64 = scmp.eq.s32.totalorder %s19, 0
    %p65 = por %p63, %p64
    %p66 = scmp.ne.s32.totalorder %s55, %s58
    %p67 = scmp.eq.s32.totalorder %s24, 1
    %p68 = por %p66, %p67
    %p69 = scmp.ne.s32.totalorder %s58, %s59
    %p70 = scmp.eq.s32.totalorder %s24, 0
    %p71 = por %p69, %p70
    %p72 = scmp.ne.s32.totalorder %s58, %s59
    %p73 = scmp.eq.s32.totalorder %s25, 1
    %p74 = por %p72, %p73
    %p76 = scmp.ne.s32.totalorder %s59, %s75
    %p77 = scmp.eq.s32.totalorder %s25, 0
    %p78 = por %p76, %p77
    %s79 = ssub.s32 %s19, %s26
    %p80 = scmp.eq.s32.totalorder %s79, 0
    %s82 = sadd.s32 %s81, 1
    %s83 = scalar_select %p80, %s81, %s82
    %p86 = pneg %p80
    %p87 = scmp.eq.s32.totalorder %s19, 1
    %p88 = por %p86, %p87
    %p89 = scmp.ne.s32.totalorder %s81, %s84
    %p90 = scmp.eq.s32.totalorder %s19, 0
    %p91 = por %p89, %p90
    %p92 = scmp.ne.s32.totalorder %s81, %s84
    %p93 = scmp.eq.s32.totalorder %s24, 1
    %p94 = por %p92, %p93
    %p95 = scmp.ne.s32.totalorder %s84, %s85
    %p96 = scmp.eq.s32.totalorder %s24, 0
    %p97 = por %p95, %p96
    %p98 = scmp.ne.s32.totalorder %s84, %s85
    %p99 = scmp.eq.s32.totalorder %s25, 1
    %p100 = por %p98, %p99
    %p102 = scmp.ne.s32.totalorder %s85, %s101
    %p103 = scmp.eq.s32.totalorder %s25, 0
    %p104 = por %p102, %p103
    %s105 = ssub.s32 %s19, %s26
    %p106 = scmp.eq.s32.totalorder %s105, 0
    %s108 = sadd.s32 %s107, 1
    %s109 = scalar_select %p106, %s107, %s108
    %p112 = pneg %p106
    %p113 = scmp.eq.s32.totalorder %s19, 1
    %p114 = por %p112, %p113
    %p115 = scmp.ne.s32.totalorder %s107, %s110
    %p116 = scmp.eq.s32.totalorder %s19, 0
    %p117 = por %p115, %p116
    %p118 = scmp.ne.s32.totalorder %s107, %s110
    %p119 = scmp.eq.s32.totalorder %s24, 1
    %p120 = por %p118, %p119
    %p121 = scmp.ne.s32.totalorder %s110, %s111
    %p122 = scmp.eq.s32.totalorder %s24, 0
    %p123 = por %p121, %p122
    %p124 = scmp.ne.s32.totalorder %s110, %s111
    %p125 = scmp.eq.s32.totalorder %s25, 1
    %p126 = por %p124, %p125
    %p128 = scmp.ne.s32.totalorder %s111, %s127
    %p129 = scmp.eq.s32.totalorder %s25, 0
    %p130 = por %p128, %p129
    %s132 = sadd.s32 %s131, 1
    %p135 = scmp.eq.s32.totalorder %s19, 1
    %p136 = scmp.ne.s32.totalorder %s131, %s133
    %p137 = scmp.eq.s32.totalorder %s19, 0
    %p138 = por %p136, %p137
    %p139 = scmp.ne.s32.totalorder %s131, %s133
    %p140 = scmp.eq.s32.totalorder %s24, 1
    %p141 = por %p139, %p140
    %p142 = scmp.ne.s32.totalorder %s133, %s134
    %p143 = scmp.eq.s32.totalorder %s24, 0
    %p144 = por %p142, %p143
    %p145 = scmp.ne.s32.totalorder %s133, %s134
    %p146 = scmp.eq.s32.totalorder %s25, 1
    %p147 = por %p145, %p146
    %p149 = scmp.ne.s32.totalorder %s134, %s148
    %p150 = scmp.eq.s32.totalorder %s25, 0
    %p151 = por %p149, %p150
    %s153 = sadd.s32 %s152, 1
    %p156 = scmp.eq.s32.totalorder %s19, 1
    %p157 = scmp.ne.s32.totalorder %s152, %s154
    %p158 = scmp.eq.s32.totalorder %s19, 0
    %p159 = por %p157, %p158
    %p160 = scmp.ne.s32.totalorder %s152, %s154
    %p161 = scmp.eq.s32.totalorder %s24, 1
    %p162 = por %p160, %p161
    %p163 = scmp.ne.s32.totalorder %s154, %s155
    %p164 = scmp.eq.s32.totalorder %s24, 0
    %p165 = por %p163, %p164
    %p166 = scmp.ne.s32.totalorder %s154, %s155
    %p167 = scmp.eq.s32.totalorder %s25, 1
    %p168 = por %p166, %p167
    %p170 = scmp.ne.s32.totalorder %s155, %s169
    %p171 = scmp.eq.s32.totalorder %s25, 0
    %p172 = por %p170, %p171
    %s174 = sadd.s32 %s173, 1
    %p177 = scmp.eq.s32.totalorder %s19, 1
    %p178 = scmp.ne.s32.totalorder %s173, %s175
    %p179 = scmp.eq.s32.totalorder %s19, 0
    %p180 = por %p178, %p179
    %p181 = scmp.ne.s32.totalorder %s173, %s175
    %p182 = scmp.eq.s32.totalorder %s24, 1
    %p183 = por %p181, %p182
    %p184 = scmp.ne.s32.totalorder %s175, %s176
    %p185 = scmp.eq.s32.totalorder %s24, 0
    %p186 = por %p184, %p185
    %p187 = scmp.ne.s32.totalorder %s175, %s176
    %p188 = scmp.eq.s32.totalorder %s25, 1
    %p189 = por %p187, %p188
    %p191 = scmp.ne.s32.totalorder %s176, %s190
    %p192 = scmp.eq.s32.totalorder %s25, 0
    %p193 = por %p191, %p192
    %s195 = sadd.s32 %s194, 1
    %p198 = scmp.eq.s32.totalorder %s19, 1
    %p199 = scmp.ne.s32.totalorder %s194, %s196
    %p200 = scmp.eq.s32.totalorder %s19, 0
    %p201 = por %p199, %p200
    %p202 = scmp.ne.s32.totalorder %s194, %s196
    %p203 = scmp.eq.s32.totalorder %s24, 1
    %p204 = por %p202, %p203
    %p205 = scmp.ne.s32.totalorder %s196, %s197
    %p206 = scmp.eq.s32.totalorder %s24, 0
    %p207 = por %p205, %p206
    %p208 = scmp.ne.s32.totalorder %s196, %s197
    %p209 = scmp.eq.s32.totalorder %s25, 1
    %p210 = por %p208, %p209
    %p212 = scmp.ne.s32.totalorder %s197, %s211
    %p213 = scmp.eq.s32.totalorder %s25, 0
    %p214 = por %p212, %p213
    %s216 = sadd.s32 %s215, 1
    %p219 = scmp.eq.s32.totalorder %s19, 1
    %p220 = scmp.ne.s32.totalorder %s215, %s217
    %p221 = scmp.eq.s32.totalorder %s19, 0
    %p222 = por %p220, %p221
    %p223 = scmp.ne.s32.totalorder %s215, %s217
    %p224 = scmp.eq.s32.totalorder %s24, 1
    %p225 = por %p223, %p224
    %p226 = scmp.ne.s32.totalorder %s217, %s218
    %p227 = scmp.eq.s32.totalorder %s24, 0
    %p228 = por %p226, %p227
    %p229 = scmp.ne.s32.totalorder %s217, %s218
    %p230 = scmp.eq.s32.totalorder %s25, 1
    %p231 = por %p229, %p230
    %p233 = scmp.ne.s32.totalorder %s218, %s232
    %p234 = scmp.eq.s32.totalorder %s25, 0
    %p235 = por %p233, %p234
    %s237 = sadd.s32 %s236, 1
    %p240 = scmp.eq.s32.totalorder %s19, 1
    %p241 = scmp.ne.s32.totalorder %s236, %s238
    %p242 = scmp.eq.s32.totalorder %s19, 0
    %p243 = por %p241, %p242
    %p244 = scmp.ne.s32.totalorder %s236, %s238
    %p245 = scmp.eq.s32.totalorder %s24, 1
    %p246 = por %p244, %p245
    %p247 = scmp.ne.s32.totalorder %s238, %s239
    %p248 = scmp.eq.s32.totalorder %s24, 0
    %p249 = por %p247, %p248
    %p250 = scmp.ne.s32.totalorder %s238, %s239
    %p251 = scmp.eq.s32.totalorder %s25, 1
    %p252 = por %p250, %p251
    %p254 = scmp.ne.s32.totalorder %s239, %s253
    %p255 = scmp.eq.s32.totalorder %s25, 0
    %p256 = por %p254, %p255
    %s258 = sadd.s32 %s257, 1
    %p261 = scmp.eq.s32.totalorder %s19, 1
    %p262 = scmp.ne.s32.totalorder %s257, %s259
    %p263 = scmp.eq.s32.totalorder %s19, 0
    %p264 = por %p262, %p263
    %p265 = scmp.ne.s32.totalorder %s257, %s259
    %p266 = scmp.eq.s32.totalorder %s24, 1
    %p267 = por %p265, %p266
    %p268 = scmp.ne.s32.totalorder %s259, %s260
    %p269 = scmp.eq.s32.totalorder %s24, 0
    %p270 = por %p268, %p269
    %p271 = scmp.ne.s32.totalorder %s259, %s260
    %p272 = scmp.eq.s32.totalorder %s25, 1
    %p273 = por %p271, %p272
    %p275 = scmp.ne.s32.totalorder %s260, %s274
    %p276 = scmp.eq.s32.totalorder %s25, 0
    %p277 = por %p275, %p276
    %s279 = sadd.s32 %s278, 1
    %p282 = scmp.eq.s32.totalorder %s19, 1
    %p283 = scmp.ne.s32.totalorder %s278, %s280
    %p284 = scmp.eq.s32.totalorder %s19, 0
    %p285 = por %p283, %p284
    %p286 = scmp.ne.s32.totalorder %s278, %s280
    %p287 = scmp.eq.s32.totalorder %s24, 1
    %p288 = por %p286, %p287
    %p289 = scmp.ne.s32.totalorder %s280, %s281
    %p290 = scmp.eq.s32.totalorder %s24, 0
    %p291 = por %p289, %p290
    %p292 = scmp.ne.s32.totalorder %s280, %s281
    %p293 = scmp.eq.s32.totalorder %s25, 1
    %p294 = por %p292, %p293
    %p296 = scmp.ne.s32.totalorder %s281, %s295
    %p297 = scmp.eq.s32.totalorder %s25, 0
    %p298 = por %p296, %p297
    %s300 = sadd.s32 %s299, 1
    %p303 = scmp.eq.s32.totalorder %s19, 1
    %p304 = scmp.ne.s32.totalorder %s299, %s301
    %p305 = scmp.eq.s32.totalorder %s19, 0
    %p306 = por %p304, %p305
    %p307 = scmp.ne.s32.totalorder %s299, %s301
    %p308 = scmp.eq.s32.totalorder %s24, 1
    %p309 = por %p307, %p308
    %p310 = scmp.ne.s32.totalorder %s301, %s302
    %p311 = scmp.eq.s32.totalorder %s24, 0
    %p312 = por %p310, %p311
    %p313 = scmp.ne.s32.totalorder %s301, %s302
    %p314 = scmp.eq.s32.totalorder %s25, 1
    %p315 = por %p313, %p314
    %p317 = scmp.ne.s32.totalorder %s302, %s316
    %p318 = scmp.eq.s32.totalorder %s25, 0
    %p319 = por %p317, %p318
    %s320 = ssub.s32 %s19, %s26
    %p321 = scmp.eq.s32.totalorder %s320, 0
    %s323 = sadd.s32 %s322, 1
    %s324 = scalar_select %p321, %s322, %s323
    %p327 = pneg %p321
    %p328 = scmp.eq.s32.totalorder %s19, 1
    %p329 = por %p327, %p328
    %p330 = scmp.ne.s32.totalorder %s322, %s325
    %p331 = scmp.eq.s32.totalorder %s19, 0
    %p332 = por %p330, %p331
    %p333 = scmp.ne.s32.totalorder %s322, %s325
    %p334 = scmp.eq.s32.totalorder %s24, 1
    %p335 = por %p333, %p334
    %p336 = scmp.ne.s32.totalorder %s325, %s326
    %p337 = scmp.eq.s32.totalorder %s24, 0
    %p338 = por %p336, %p337
    %p339 = scmp.ne.s32.totalorder %s325, %s326
    %p340 = scmp.eq.s32.totalorder %s25, 1
    %p341 = por %p339, %p340
    %p343 = scmp.ne.s32.totalorder %s326, %s342
    %p344 = scmp.eq.s32.totalorder %s25, 0
    %p345 = por %p343, %p344
    %p346 = scmp.le.s32.totalorder 1, %s19
    %p347 = scmp.lt.s32.totalorder %s19, 3
    %p348 = pnand %p346, %p347
    %p349 = pneg %p348
    // Predicated region
    $region9: #{moe3_forward.1} parent=5 // pred_check
      _
    $region10: #{moe3_forward.1} parent=5 // pred_check_branch
      %351 = sbr.rel (%p348) target = $region12
    $region11: #{moe3_forward.1} parent=5 // pred_region
      %s352 = ssub.s32 %s19, 1
      // Predicated region
      $region13: #{moe3_forward.1} parent=11 // pred_check
        %p353 = pneg %p144
      $region14: #{moe3_forward.1} parent=11 // pred_check_branch
        %355 = sbr.rel (%p353) target = $region16
      $region15: #{moe3_forward.1} parent=11 // pred_region
        _
      $region16: #{moe3_forward.1} parent=11 // pred_fallthru
        _
      // Predicated region
      $region17: #{moe3_forward.1} parent=11 // pred_check
        %p356 = pneg %p165
      $region18: #{moe3_forward.1} parent=11 // pred_check_branch
        %358 = sbr.rel (%p356) target = $region20
      $region19: #{moe3_forward.1} parent=11 // pred_region
        _
      $region20: #{moe3_forward.1} parent=11 // pred_fallthru
        _
      // Predicated region
      $region21: #{moe3_forward.1} parent=11 // pred_check
        %p359 = pneg %p186
      $region22: #{moe3_forward.1} parent=11 // pred_check_branch
        %361 = sbr.rel (%p359) target = $region24
      $region23: #{moe3_forward.1} parent=11 // pred_region
        _
      $region24: #{moe3_forward.1} parent=11 // pred_fallthru
        _
      // Predicated region
      $region25: #{moe3_forward.1} parent=11 // pred_check
        %p362 = pneg %p207
      $region26: #{moe3_forward.1} parent=11 // pred_check_branch
        %364 = sbr.rel (%p362) target = $region28
      $region27: #{moe3_forward.1} parent=11 // pred_region
        _
      $region28: #{moe3_forward.1} parent=11 // pred_fallthru
        _
      // Predicated region
      $region29: #{moe3_forward.1} parent=11 // pred_check
        %p365 = pneg %p228
      $region30: #{moe3_forward.1} parent=11 // pred_check_branch
        %367 = sbr.rel (%p365) target = $region32
      $region31: #{moe3_forward.1} parent=11 // pred_region
        _
      $region32: #{moe3_forward.1} parent=11 // pred_fallthru
        _
      // Predicated region
      $region33: #{moe3_forward.1} parent=11 // pred_check
        %p368 = pneg %p249
      $region34: #{moe3_forward.1} parent=11 // pred_check_branch
        %370 = sbr.rel (%p368) target = $region36
      $region35: #{moe3_forward.1} parent=11 // pred_region
        _
      $region36: #{moe3_forward.1} parent=11 // pred_fallthru
        _
      // Predicated region
      $region37: #{moe3_forward.1} parent=11 // pred_check
        %p371 = pneg %p270
      $region38: #{moe3_forward.1} parent=11 // pred_check_branch
        %373 = sbr.rel (%p371) target = $region40
      $region39: #{moe3_forward.1} parent=11 // pred_region
        _
      $region40: #{moe3_forward.1} parent=11 // pred_fallthru
        _
      // Predicated region
      $region41: #{moe3_forward.1} parent=11 // pred_check
        %p374 = pneg %p291
      $region42: #{moe3_forward.1} parent=11 // pred_check_branch
        %376 = sbr.rel (%p374) target = $region44
      $region43: #{moe3_forward.1} parent=11 // pred_region
        _
      $region44: #{moe3_forward.1} parent=11 // pred_fallthru
        _
      // Predicated region
      $region45: #{moe3_forward.1} parent=11 // pred_check
        %p377 = pneg %p312
      $region46: #{moe3_forward.1} parent=11 // pred_check_branch
        %379 = sbr.rel (%p377) target = $region48
      $region47: #{moe3_forward.1} parent=11 // pred_region
        _
      $region48: #{moe3_forward.1} parent=11 // pred_fallthru
        _
    $region12: #{moe3_forward.1} parent=5 // pred_fallthru
      _
    %p380 = scmp.lt.s32.totalorder %s19, 2
    // Predicated region
    $region49: #{moe3_forward.1} parent=5 // pred_check
      %p381 = pneg %p380
    $region50: #{moe3_forward.1} parent=5 // pred_check_branch
      %383 = sbr.rel (%p381) target = $region52
    $region51: #{moe3_forward.1} parent=5 // pred_region
      // Predicated region
      $region53: #{moe3_forward.1} parent=51 // pred_check
        %p384 = pneg %p39
      $region54: #{moe3_forward.1} parent=51 // pred_check_branch
        %386 = sbr.rel (%p384) target = $region56
      $region55: #{moe3_forward.1} parent=51 // pred_region
        %s387 = smul.u32 2, %s19
        %p388 = scmp.lt.s32.totalorder %s387, 3
        %s389 = scalar_select %p388, %s387, 3
        %s390 = smul.addr %s389, 8
        %s391 = scalar_lea.vmem %s0, %s390
        %s392 = smul.u32 2, %s19
      $region56: #{moe3_forward.1} parent=51 // pred_fallthru
        _
      // Predicated region
      $region57: #{moe3_forward.1} parent=51 // pred_check
        %p393 = pneg %p65
      $region58: #{moe3_forward.1} parent=51 // pred_check_branch
        %395 = sbr.rel (%p393) target = $region60
      $region59: #{moe3_forward.1} parent=51 // pred_region
        %s396 = smul.u32 2, %s19
        %p397 = scmp.lt.s32.totalorder %s396, 3
        %s398 = scalar_select %p397, %s396, 3
        %s399 = smul.addr %s398, 8
        %s400 = scalar_lea.vmem %s1, %s399
        %s401 = smul.u32 2, %s19
      $region60: #{moe3_forward.1} parent=51 // pred_fallthru
        _
      // Predicated region
      $region61: #{moe3_forward.1} parent=51 // pred_check
        %p402 = pneg %p91
      $region62: #{moe3_forward.1} parent=51 // pred_check_branch
        %404 = sbr.rel (%p402) target = $region64
      $region63: #{moe3_forward.1} parent=51 // pred_region
        %s405 = smul.u32 2, %s19
        %p406 = scmp.lt.s32.totalorder %s405, 3
        %s407 = scalar_select %p406, %s405, 3
        %s408 = smul.addr %s407, 8
        %s409 = scalar_lea.vmem %s2, %s408
        %s410 = smul.u32 2, %s19
      $region64: #{moe3_forward.1} parent=51 // pred_fallthru
        _
      // Predicated region
      $region65: #{moe3_forward.1} parent=51 // pred_check
        %p411 = pneg %p117
      $region66: #{moe3_forward.1} parent=51 // pred_check_branch
        %413 = sbr.rel (%p411) target = $region68
      $region67: #{moe3_forward.1} parent=51 // pred_region
        %s414 = smul.u32 2, %s19
        %p415 = scmp.lt.s32.totalorder %s414, 3
        %s416 = scalar_select %p415, %s414, 3
        %s417 = smul.addr %s416, 8
        %s418 = scalar_lea.vmem %s3, %s417
        %s419 = smul.u32 2, %s19
      $region68: #{moe3_forward.1} parent=51 // pred_fallthru
        _
    $region52: #{moe3_forward.1} parent=5 // pred_fallthru
      _
    %p420 = scmp.le.s32.totalorder 1, %s19
    %p421 = scmp.lt.s32.totalorder %s19, 3
    %p422 = pnand %p420, %p421
    %p423 = pneg %p422
    // Predicated region
    $region69: #{moe3_forward.1} parent=5 // pred_check
      _
    $region70: #{moe3_forward.1} parent=5 // pred_check_branch
      %425 = sbr.rel (%p422) target = $region72
    $region71: #{moe3_forward.1} parent=5 // pred_region
      %s426 = ssub.s32 %s19, 1
      %s427 = smul.u32 2, %s24
      %p428 = scmp.lt.s32.totalorder %s427, 3
      %s429 = scalar_select %p428, %s427, 3
      %s430 = smul.addr %s429, 8
      %s431 = scalar_lea.vmem %s0, %s430
      %p432 = pneg %p45
      %p433 = pneg %p42
      %s434 = smul.u32 2, %s24
      %p435 = scmp.lt.s32.totalorder %s434, 3
      %s436 = scalar_select %p435, %s434, 3
      %s437 = smul.addr %s436, 8
      %s438 = scalar_lea.vmem %s1, %s437
      %p439 = pneg %p71
      %p440 = pneg %p68
      %s441 = smul.u32 2, %s24
      %p442 = scmp.lt.s32.totalorder %s441, 3
      %s443 = scalar_select %p442, %s441, 3
      %s444 = smul.addr %s443, 8
      %s445 = scalar_lea.vmem %s2, %s444
      %p446 = pneg %p97
      %p447 = pneg %p94
      %s448 = smul.u32 2, %s24
      %p449 = scmp.lt.s32.totalorder %s448, 3
      %s450 = scalar_select %p449, %s448, 3
      %s451 = smul.addr %s450, 8
      %s452 = scalar_lea.vmem %s3, %s451
      %p453 = pneg %p123
      %p454 = pneg %p120
      %p455 = pneg %p144
      %p456 = pneg %p141
      %p457 = pneg %p165
      %p458 = pneg %p162
      %p459 = pneg %p186
      %p460 = pneg %p183
      %p461 = pneg %p207
      %p462 = pneg %p204
      %p463 = pneg %p228
      %p464 = pneg %p225
      %p465 = pneg %p249
      %p466 = pneg %p246
      %p467 = pneg %p270
      %p468 = pneg %p267
      %p469 = pneg %p291
      %p470 = pneg %p288
      %p471 = pneg %p312
      %p472 = pneg %p309
      %p473 = pneg %p338
      %p474 = pneg %p335
      %s475 = smul.u32 2, %s24
      %p476 = scmp.lt.s32.totalorder %s475, 3
      %s477 = scalar_select %p476, %s475, 3
      %s478 = smul.addr %s477, 8
      %s479 = scalar_lea.vmem %s13, %s478
      %s480 = smul.u32 2, %s24
      %p481 = scmp.lt.s32.totalorder %s480, 3
      %s482 = scalar_select %p481, %s480, 3
      %s483 = smul.addr %s482, 8
      %s484 = scalar_lea.vmem %s0, %s483
      %s485 = smul.u32 2, %s24
      %s486 = smul.u32 2, %s24
      %p487 = scmp.lt.s32.totalorder %s486, 3
      %s488 = scalar_select %p487, %s486, 3
      %s489 = smul.addr %s488, 8
      %s490 = scalar_lea.vmem %s1, %s489
      %s491 = smul.u32 2, %s24
      %s492 = smul.u32 2, %s24
      %p493 = scmp.lt.s32.totalorder %s492, 3
      %s494 = scalar_select %p493, %s492, 3
      %s495 = smul.addr %s494, 8
      %s496 = scalar_lea.vmem %s2, %s495
      %s497 = smul.u32 2, %s24
      %s498 = smul.u32 2, %s24
      %p499 = scmp.lt.s32.totalorder %s498, 3
      %s500 = scalar_select %p499, %s498, 3
      %s501 = smul.addr %s500, 8
      %s502 = scalar_lea.vmem %s3, %s501
      %s503 = smul.u32 2, %s24
      %s504 = smul.u32 2, %s24
      %p505 = scmp.lt.s32.totalorder %s504, 3
      %s506 = scalar_select %p505, %s504, 3
      %s507 = smul.addr %s506, 8
      %s508 = scalar_lea.vmem %s13, %s507
      %s509 = smul.u32 2, %s24
      %v510 = vld [vmem:[%s484] sm:$0xff]
      %v511 = vld [vmem:[%s484 + $0x8] sm:$0xff]
      %v512 = vld [vmem:[%s4] sm:$0xff]
      %v513 = vld [vmem:[%s4 + $0x8] sm:$0xff]
      %v514 = vld [vmem:[%s4 + $0x10] sm:$0xff]
      %v515 = vld [vmem:[%s4 + $0x18] sm:$0xff]
      %vm516 = vcmask 261120
      %v518 = vsel %vm516, %v510, 0
      %v521 = vsel %vm516, %v511, 0
      %523 = vmatprep.subr.mxu0 0.0
      %524 = vmatpush1.msra.mxu0 %v512
      %525 = vmatprep.subr.mxu0 0.0
      %526 = vmatpush1.msra.mxu0 %v513
      %527 = vmatprep.subr.mxu0 0.0
      %528 = vmatpush1.msra.mxu0 %v514
      %529 = vmatprep.subr.mxu0 0.0
      %530 = vmatpush1.msra.mxu0 %v515
      %531 = vmatprep.subr.mxu0 0.0
      %532 = vmatpush1.msra.mxu0 0.0
      %533 = vmatprep.subr.mxu0 0.0
      %534 = vmatpush1.msra.mxu0 0.0
      %535 = vmatprep.subr.mxu0 0.0
      %536 = vmatpush1.msra.mxu0 0.0
      %537 = vmatprep.subr.mxu0 0.0
      %538 = vmatpush1.msra.mxu0 0.0
      %539 = vmatprep.subr.mxu0 0.0
      %540 = vmatpush1.msra.mxu0 0.0
      %541 = vmatprep.subr.mxu0 0.0
      %542 = vmatpush1.msra.mxu0 0.0
      %543 = vmatprep.subr.mxu0 0.0
      %544 = vmatpush1.msra.mxu0 0.0
      %545 = vmatprep.subr.mxu0 0.0
      %546 = vmatpush1.msra.mxu0 0.0
      %547 = vmatprep.subr.mxu0 0.0
      %548 = vmatpush1.msra.mxu0 0.0
      %549 = vmatprep.subr.mxu0 0.0
      %550 = vmatpush1.msra.mxu0 0.0
      %551 = vmatprep.subr.mxu0 0.0
      %552 = vmatpush1.msra.mxu0 0.0
      %553 = vmatprep.subr.mxu0 0.0
      %554 = vmatpush1.msra.mxu0 0.0
      %555 = vmatprep.subr.mxu0 0.0
      %556 = vmatpush1.msra.mxu0 0.0
      %557 = vmatprep.subr.mxu0 0.0
      %558 = vmatpush1.msra.mxu0 0.0
      %559 = vmatprep.subr.mxu0 0.0
      %560 = vmatpush1.msra.mxu0 0.0
      %561 = vmatprep.subr.mxu0 0.0
      %562 = vmatpush1.msra.mxu0 0.0
      %563 = vmatprep.subr.mxu0 0.0
      %564 = vmatpush1.msra.mxu0 0.0
      %565 = vmatprep.subr.mxu0 0.0
      %566 = vmatpush1.msra.mxu0 0.0
      %567 = vmatprep.subr.mxu0 0.0
      %568 = vmatpush1.msra.mxu0 0.0
      %569 = vmatprep.subr.mxu0 0.0
      %570 = vmatpush1.msra.mxu0 0.0
      %571 = vmatprep.subr.mxu0 0.0
      %572 = vmatpush1.msra.mxu0 0.0
      %573 = vmatprep.subr.mxu0 0.0
      %574 = vmatpush1.msra.mxu0 0.0
      %575 = vmatprep.subr.mxu0 0.0
      %576 = vmatpush1.msra.mxu0 0.0
      %577 = vmatprep.subr.mxu0 0.0
      %578 = vmatpush1.msra.mxu0 0.0
      %579 = vmatprep.subr.mxu0 0.0
      %580 = vmatpush1.msra.mxu0 0.0
      %581 = vmatprep.subr.mxu0 0.0
      %582 = vmatpush1.msra.mxu0 0.0
      %583 = vmatprep.subr.mxu0 0.0
      %584 = vmatpush1.msra.mxu0 0.0
      %585 = vmatprep.subr.mxu0 0.0
      %586 = vmatpush1.msra.mxu0 0.0
      %587 = vmatprep.mubr.f32.mxu0 0.0
      %588 = vmatmul.mubr.f32.gmra.mrb[0].mxu0 %v518
      %v589 = vpop.f32.mrb[0].mxu0
      %v590 = vadd.f32 0.0, %v589
      %v591 = vpop.f32.mrb[0].mxu0
      %592 = vmatprep.mubr.f32.mxu0 0.0
      %593 = vmatmul.mubr.f32.gmra.mrb[0].mxu0 %v521
      %v594 = vpop.f32.mrb[0].mxu0
      %v595 = vadd.f32 0.0, %v594
      %v596 = vpop.f32.mrb[0].mxu0
      %597 = vdwg.mxu0
      %v598 = vld [vmem:[%s490] sm:$0xff]
      %v599 = vld [vmem:[%s490 + $0x8] sm:$0xff]
      %v600 = vmul.f32 %v598, %v590
      %v601 = vmul.f32 %v599, %v595
      %v602 = vld [vmem:[%s5] sm:$0xff]
      %v603 = vld [vmem:[%s5 + $0x8] sm:$0xff]
      %v604 = vld [vmem:[%s5 + $0x10] sm:$0xff]
      %v605 = vld [vmem:[%s5 + $0x18] sm:$0xff]
      %v606 = vld [vmem:[%s5 + $0x20] sm:$0xff]
      %v607 = vld [vmem:[%s5 + $0x28] sm:$0xff]
      %v608 = vld [vmem:[%s5 + $0x30] sm:$0xff]
      %v609 = vld [vmem:[%s5 + $0x38] sm:$0xff]
      %v610 = vld [vmem:[%s6] sm:$0xff]
      %v611 = vld [vmem:[%s6 + $0x8] sm:$0xff]
      %v612 = vld [vmem:[%s6 + $0x10] sm:$0xff]
      %v613 = vld [vmem:[%s6 + $0x18] sm:$0xff]
      %v614 = vld [vmem:[%s6 + $0x20] sm:$0xff]
      %v615 = vld [vmem:[%s6 + $0x28] sm:$0xff]
      %v616 = vld [vmem:[%s6 + $0x30] sm:$0xff]
      %v617 = vld [vmem:[%s6 + $0x38] sm:$0xff]
      %vm618 = vcmask 523264
      %v620 = vsel %vm618, %v598, 0
      %v623 = vsel %vm618, %v599, 0
      %625 = vmatprep.subr.mxu0 0.0
      %626 = vmatpush1.msra.mxu0 %v610
      %627 = vmatprep.subr.mxu0 0.0
      %628 = vmatpush1.msra.mxu0 %v611
      %629 = vmatprep.subr.mxu0 0.0
      %630 = vmatpush1.msra.mxu0 %v612
      %631 = vmatprep.subr.mxu0 0.0
      %632 = vmatpush1.msra.mxu0 %v613
      %633 = vmatprep.subr.mxu0 0.0
      %634 = vmatpush1.msra.mxu0 %v614
      %635 = vmatprep.subr.mxu0 0.0
      %636 = vmatpush1.msra.mxu0 %v615
      %637 = vmatprep.subr.mxu0 0.0
      %638 = vmatpush1.msra.mxu0 %v616
      %639 = vmatprep.subr.mxu0 0.0
      %640 = vmatpush1.msra.mxu0 %v617
      %641 = vmatprep.subr.mxu0 0.0
      %642 = vmatpush1.msra.mxu0 0.0
      %643 = vmatprep.subr.mxu0 0.0
      %644 = vmatpush1.msra.mxu0 0.0
      %645 = vmatprep.subr.mxu0 0.0
      %646 = vmatpush1.msra.mxu0 0.0
      %647 = vmatprep.subr.mxu0 0.0
      %648 = vmatpush1.msra.mxu0 0.0
      %649 = vmatprep.subr.mxu0 0.0
      %650 = vmatpush1.msra.mxu0 0.0
      %651 = vmatprep.subr.mxu0 0.0
      %652 = vmatpush1.msra.mxu0 0.0
      %653 = vmatprep.subr.mxu0 0.0
      %654 = vmatpush1.msra.mxu0 0.0
      %655 = vmatprep.subr.mxu0 0.0
      %656 = vmatpush1.msra.mxu0 0.0
      %657 = vmatprep.subr.mxu0 0.0
      %658 = vmatpush1.msra.mxu0 0.0
      %659 = vmatprep.subr.mxu0 0.0
      %660 = vmatpush1.msra.mxu0 0.0
      %661 = vmatprep.subr.mxu0 0.0
      %662 = vmatpush1.msra.mxu0 0.0
      %663 = vmatprep.subr.mxu0 0.0
      %664 = vmatpush1.msra.mxu0 0.0
      %665 = vmatprep.subr.mxu0 0.0
      %666 = vmatpush1.msra.mxu0 0.0
      %667 = vmatprep.subr.mxu0 0.0
      %668 = vmatpush1.msra.mxu0 0.0
      %669 = vmatprep.subr.mxu0 0.0
      %670 = vmatpush1.msra.mxu0 0.0
      %671 = vmatprep.subr.mxu0 0.0
      %672 = vmatpush1.msra.mxu0 0.0
      %673 = vmatprep.subr.mxu0 0.0
      %674 = vmatpush1.msra.mxu0 0.0
      %675 = vmatprep.subr.mxu0 0.0
      %676 = vmatpush1.msra.mxu0 0.0
      %677 = vmatprep.subr.mxu0 0.0
      %678 = vmatpush1.msra.mxu0 0.0
      %679 = vmatprep.subr.mxu0 0.0
      %680 = vmatpush1.msra.mxu0 0.0
      %681 = vmatprep.subr.mxu0 0.0
      %682 = vmatpush1.msra.mxu0 0.0
      %683 = vmatprep.subr.mxu0 0.0
      %684 = vmatpush1.msra.mxu0 0.0
      %685 = vmatprep.subr.mxu0 0.0
      %686 = vmatpush1.msra.mxu0 0.0
      %687 = vmatprep.subr.mxu0 0.0
      %688 = vmatpush1.msra.mxu0 0.0
      %689 = vmatprep.mubr.f32.mxu0 0.0
      %690 = vmatmul.mubr.f32.gmra.mrb[0].mxu0 %v620
      %v691 = vpop.f32.mrb[0].mxu0
      %v692 = vadd.f32 0.0, %v691
      %v693 = vpop.f32.mrb[0].mxu0
      %694 = vmatprep.mubr.f32.mxu0 0.0
      %695 = vmatmul.mubr.f32.gmra.mrb[0].mxu0 %v623
      %v696 = vpop.f32.mrb[0].mxu0
      %v697 = vadd.f32 0.0, %v696
      %v698 = vpop.f32.mrb[0].mxu0
      %699 = vdwg.mxu0
      %v701 = vsel %vm618, %v600, 0
      %v704 = vsel %vm618, %v601, 0
      %706 = vmatprep.subr.mxu0 0.0
      %707 = vmatpush1.msra.mxu0 %v602
      %708 = vmatprep.subr.mxu0 0.0
      %709 = vmatpush1.msra.mxu0 %v603
      %710 = vmatprep.subr.mxu0 0.0
      %711 = vmatpush1.msra.mxu0 %v604
      %712 = vmatprep.subr.mxu0 0.0
      %713 = vmatpush1.msra.mxu0 %v605
      %714 = vmatprep.subr.mxu0 0.0
      %715 = vmatpush1.msra.mxu0 %v606
      %716 = vmatprep.subr.mxu0 0.0
      %717 = vmatpush1.msra.mxu0 %v607
      %718 = vmatprep.subr.mxu0 0.0
      %719 = vmatpush1.msra.mxu0 %v608
      %720 = vmatprep.subr.mxu0 0.0
      %721 = vmatpush1.msra.mxu0 %v609
      %722 = vmatprep.subr.mxu0 0.0
      %723 = vmatpush1.msra.mxu0 0.0
      %724 = vmatprep.subr.mxu0 0.0
      %725 = vmatpush1.msra.mxu0 0.0
      %726 = vmatprep.subr.mxu0 0.0
      %727 = vmatpush1.msra.mxu0 0.0
      %728 = vmatprep.subr.mxu0 0.0
      %729 = vmatpush1.msra.mxu0 0.0
      %730 = vmatprep.subr.mxu0 0.0
      %731 = vmatpush1.msra.mxu0 0.0
      %732 = vmatprep.subr.mxu0 0.0
      %733 = vmatpush1.msra.mxu0 0.0
      %734 = vmatprep.subr.mxu0 0.0
      %735 = vmatpush1.msra.mxu0 0.0
      %736 = vmatprep.subr.mxu0 0.0
      %737 = vmatpush1.msra.mxu0 0.0
      %738 = vmatprep.subr.mxu0 0.0
      %739 = vmatpush1.msra.mxu0 0.0
      %740 = vmatprep.subr.mxu0 0.0
      %741 = vmatpush1.msra.mxu0 0.0
      %742 = vmatprep.subr.mxu0 0.0
      %743 = vmatpush1.msra.mxu0 0.0
      %744 = vmatprep.subr.mxu0 0.0
      %745 = vmatpush1.msra.mxu0 0.0
      %746 = vmatprep.subr.mxu0 0.0
      %747 = vmatpush1.msra.mxu0 0.0
      %748 = vmatprep.subr.mxu0 0.0
      %749 = vmatpush1.msra.mxu0 0.0
      %750 = vmatprep.subr.mxu0 0.0
      %751 = vmatpush1.msra.mxu0 0.0
      %752 = vmatprep.subr.mxu0 0.0
      %753 = vmatpush1.msra.mxu0 0.0
      %754 = vmatprep.subr.mxu0 0.0
      %755 = vmatpush1.msra.mxu0 0.0
      %756 = vmatprep.subr.mxu0 0.0
      %757 = vmatpush1.msra.mxu0 0.0
      %758 = vmatprep.subr.mxu0 0.0
      %759 = vmatpush1.msra.mxu0 0.0
      %760 = vmatprep.subr.mxu0 0.0
      %761 = vmatpush1.msra.mxu0 0.0
      %762 = vmatprep.subr.mxu0 0.0
      %763 = vmatpush1.msra.mxu0 0.0
      %764 = vmatprep.subr.mxu0 0.0
      %765 = vmatpush1.msra.mxu0 0.0
      %766 = vmatprep.subr.mxu0 0.0
      %767 = vmatpush1.msra.mxu0 0.0
      %768 = vmatprep.subr.mxu0 0.0
      %769 = vmatpush1.msra.mxu0 0.0
      %770 = vmatprep.mubr.f32.mxu0 0.0
      %771 = vmatmul.mubr.f32.gmra.mrb[0].mxu0 %v701
      %v772 = vpop.f32.mrb[0].mxu0
      %v773 = vadd.f32 %v692, %v772
      %v774 = vpop.f32.mrb[0].mxu0
      %775 = vmatprep.mubr.f32.mxu0 0.0
      %776 = vmatmul.mubr.f32.gmra.mrb[0].mxu0 %v704
      %v777 = vpop.f32.mrb[0].mxu0
      %v778 = vadd.f32 %v697, %v777
      %v779 = vpop.f32.mrb[0].mxu0
      %780 = vdwg.mxu0
      %v781 = vld [vmem:[%s7] sm:$0xff]
      %v782 = vld [vmem:[%s7 + $0x8] sm:$0xff]
      %vm783 = vcmask 130048
      %v785 = vsel %vm783, %v773, 0
      %v788 = vsel %vm783, %v778, 0
      %790 = vmatprep.subr.mxu0 0.0
      %791 = vmatpush1.msra.mxu0 %v781
      %792 = vmatprep.subr.mxu0 0.0
      %793 = vmatpush1.msra.mxu0 %v782
      %794 = vmatprep.subr.mxu0 0.0
      %795 = vmatpush1.msra.mxu0 0.0
      %796 = vmatprep.subr.mxu0 0.0
      %797 = vmatpush1.msra.mxu0 0.0
      %798 = vmatprep.subr.mxu0 0.0
      %799 = vmatpush1.msra.mxu0 0.0
      %800 = vmatprep.subr.mxu0 0.0
      %801 = vmatpush1.msra.mxu0 0.0
      %802 = vmatprep.subr.mxu0 0.0
      %803 = vmatpush1.msra.mxu0 0.0
      %804 = vmatprep.subr.mxu0 0.0
      %805 = vmatpush1.msra.mxu0 0.0
      %806 = vmatprep.subr.mxu0 0.0
      %807 = vmatpush1.msra.mxu0 0.0
      %808 = vmatprep.subr.mxu0 0.0
      %809 = vmatpush1.msra.mxu0 0.0
      %810 = vmatprep.subr.mxu0 0.0
      %811 = vmatpush1.msra.mxu0 0.0
      %812 = vmatprep.subr.mxu0 0.0
      %813 = vmatpush1.msra.mxu0 0.0
      %814 = vmatprep.subr.mxu0 0.0
      %815 = vmatpush1.msra.mxu0 0.0
      %816 = vmatprep.subr.mxu0 0.0
      %817 = vmatpush1.msra.mxu0 0.0
      %818 = vmatprep.subr.mxu0 0.0
      %819 = vmatpush1.msra.mxu0 0.0
      %820 = vmatprep.subr.mxu0 0.0
      %821 = vmatpush1.msra.mxu0 0.0
      %822 = vmatprep.subr.mxu0 0.0
      %823 = vmatpush1.msra.mxu0 0.0
      %824 = vmatprep.subr.mxu0 0.0
      %825 = vmatpush1.msra.mxu0 0.0
      %826 = vmatprep.subr.mxu0 0.0
      %827 = vmatpush1.msra.mxu0 0.0
      %828 = vmatprep.subr.mxu0 0.0
      %829 = vmatpush1.msra.mxu0 0.0
      %830 = vmatprep.subr.mxu0 0.0
      %831 = vmatpush1.msra.mxu0 0.0
      %832 = vmatprep.subr.mxu0 0.0
      %833 = vmatpush1.msra.mxu0 0.0
      %834 = vmatprep.subr.mxu0 0.0
      %835 = vmatpush1.msra.mxu0 0.0
      %836 = vmatprep.subr.mxu0 0.0
      %837 = vmatpush1.msra.mxu0 0.0
      %838 = vmatprep.subr.mxu0 0.0
      %839 = vmatpush1.msra.mxu0 0.0
      %840 = vmatprep.subr.mxu0 0.0
      %841 = vmatpush1.msra.mxu0 0.0
      %842 = vmatprep.subr.mxu0 0.0
      %843 = vmatpush1.msra.mxu0 0.0
      %844 = vmatprep.subr.mxu0 0.0
      %845 = vmatpush1.msra.mxu0 0.0
      %846 = vmatprep.subr.mxu0 0.0
      %847 = vmatpush1.msra.mxu0 0.0
      %848 = vmatprep.subr.mxu0 0.0
      %849 = vmatpush1.msra.mxu0 0.0
      %850 = vmatprep.subr.mxu0 0.0
      %851 = vmatpush1.msra.mxu0 0.0
      %852 = vmatprep.subr.mxu0 0.0
      %853 = vmatpush1.msra.mxu0 0.0
      %854 = vmatprep.mubr.f32.mxu0 0.0
      %855 = vmatmul.mubr.f32.gmra.mrb[0].mxu0 %v785
      %v856 = vpop.f32.mrb[0].mxu0
      %v857 = vadd.f32 0.0, %v856
      %v858 = vpop.f32.mrb[0].mxu0
      %859 = vmatprep.mubr.f32.mxu0 0.0
      %860 = vmatmul.mubr.f32.gmra.mrb[0].mxu0 %v788
      %v861 = vpop.f32.mrb[0].mxu0
      %v862 = vadd.f32 0.0, %v861
      %v863 = vpop.f32.mrb[0].mxu0
      %864 = vdwg.mxu0
      %v865 = vld [vmem:[%s496] sm:$0xff]
      %v866 = vld [vmem:[%s496 + $0x8] sm:$0xff]
      %v867 = vmul.f32 %v865, %v857
      %v868 = vmul.f32 %v866, %v862
      %v869 = vld [vmem:[%s8] sm:$0xff]
      %v870 = vld [vmem:[%s8 + $0x8] sm:$0xff]
      %v871 = vld [vmem:[%s8 + $0x10] sm:$0xff]
      %v872 = vld [vmem:[%s8 + $0x18] sm:$0xff]
      %v873 = vld [vmem:[%s8 + $0x20] sm:$0xff]
      %v874 = vld [vmem:[%s8 + $0x28] sm:$0xff]
      %v875 = vld [vmem:[%s8 + $0x30] sm:$0xff]
      %v876 = vld [vmem:[%s8 + $0x38] sm:$0xff]
      %v877 = vld [vmem:[%s9] sm:$0xff]
      %v878 = vld [vmem:[%s9 + $0x8] sm:$0xff]
      %v879 = vld [vmem:[%s9 + $0x10] sm:$0xff]
      %v880 = vld [vmem:[%s9 + $0x18] sm:$0xff]
      %v881 = vld [vmem:[%s9 + $0x20] sm:$0xff]
      %v882 = vld [vmem:[%s9 + $0x28] sm:$0xff]
      %v883 = vld [vmem:[%s9 + $0x30] sm:$0xff]
      %v884 = vld [vmem:[%s9 + $0x38] sm:$0xff]
      %v886 = vsel %vm618, %v865, 0
      %v889 = vsel %vm618, %v866, 0
      %891 = vmatprep.subr.mxu0 0.0
      %892 = vmatpush1.msra.mxu0 %v877
      %893 = vmatprep.subr.mxu0 0.0
      %894 = vmatpush1.msra.mxu0 %v878
      %895 = vmatprep.subr.mxu0 0.0
      %896 = vmatpush1.msra.mxu0 %v879
      %897 = vmatprep.subr.mxu0 0.0
      %898 = vmatpush1.msra.mxu0 %v880
      %899 = vmatprep.subr.mxu0 0.0
      %900 = vmatpush1.msra.mxu0 %v881
      %901 = vmatprep.subr.mxu0 0.0
      %902 = vmatpush1.msra.mxu0 %v882
      %903 = vmatprep.subr.mxu0 0.0
      %904 = vmatpush1.msra.mxu0 %v883
      %905 = vmatprep.subr.mxu0 0.0
      %906 = vmatpush1.msra.mxu0 %v884
      %907 = vmatprep.subr.mxu0 0.0
      %908 = vmatpush1.msra.mxu0 0.0
      %909 = vmatprep.subr.mxu0 0.0
      %910 = vmatpush1.msra.mxu0 0.0
      %911 = vmatprep.subr.mxu0 0.0
      %912 = vmatpush1.msra.mxu0 0.0
      %913 = vmatprep.subr.mxu0 0.0
      %914 = vmatpush1.msra.mxu0 0.0
      %915 = vmatprep.subr.mxu0 0.0
      %916 = vmatpush1.msra.mxu0 0.0
      %917 = vmatprep.subr.mxu0 0.0
      %918 = vmatpush1.msra.mxu0 0.0
      %919 = vmatprep.subr.mxu0 0.0
      %920 = vmatpush1.msra.mxu0 0.0
      %921 = vmatprep.subr.mxu0 0.0
      %922 = vmatpush1.msra.mxu0 0.0
      %923 = vmatprep.subr.mxu0 0.0
      %924 = vmatpush1.msra.mxu0 0.0
      %925 = vmatprep.subr.mxu0 0.0
      %926 = vmatpush1.msra.mxu0 0.0
      %927 = vmatprep.subr.mxu0 0.0
      %928 = vmatpush1.msra.mxu0 0.0
      %929 = vmatprep.subr.mxu0 0.0
      %930 = vmatpush1.msra.mxu0 0.0
      %931 = vmatprep.subr.mxu0 0.0
      %932 = vmatpush1.msra.mxu0 0.0
      %933 = vmatprep.subr.mxu0 0.0
      %934 = vmatpush1.msra.mxu0 0.0
      %935 = vmatprep.subr.mxu0 0.0
      %936 = vmatpush1.msra.mxu0 0.0
      %937 = vmatprep.subr.mxu0 0.0
      %938 = vmatpush1.msra.mxu0 0.0
      %939 = vmatprep.subr.mxu0 0.0
      %940 = vmatpush1.msra.mxu0 0.0
      %941 = vmatprep.subr.mxu0 0.0
      %942 = vmatpush1.msra.mxu0 0.0
      %943 = vmatprep.subr.mxu0 0.0
      %944 = vmatpush1.msra.mxu0 0.0
      %945 = vmatprep.subr.mxu0 0.0
      %946 = vmatpush1.msra.mxu0 0.0
      %947 = vmatprep.subr.mxu0 0.0
      %948 = vmatpush1.msra.mxu0 0.0
      %949 = vmatprep.subr.mxu0 0.0
      %950 = vmatpush1.msra.mxu0 0.0
      %951 = vmatprep.subr.mxu0 0.0
      %952 = vmatpush1.msra.mxu0 0.0
      %953 = vmatprep.subr.mxu0 0.0
      %954 = vmatpush1.msra.mxu0 0.0
      %955 = vmatprep.mubr.f32.mxu0 0.0
      %956 = vmatmul.mubr.f32.gmra.mrb[0].mxu0 %v886
      %v957 = vpop.f32.mrb[0].mxu0
      %v958 = vadd.f32 0.0, %v957
      %v959 = vpop.f32.mrb[0].mxu0
      %960 = vmatprep.mubr.f32.mxu0 0.0
      %961 = vmatmul.mubr.f32.gmra.mrb[0].mxu0 %v889
      %v962 = vpop.f32.mrb[0].mxu0
      %v963 = vadd.f32 0.0, %v962
      %v964 = vpop.f32.mrb[0].mxu0
      %965 = vdwg.mxu0
      %v967 = vsel %vm618, %v867, 0
      %v970 = vsel %vm618, %v868, 0
      %972 = vmatprep.subr.mxu0 0.0
      %973 = vmatpush1.msra.mxu0 %v869
      %974 = vmatprep.subr.mxu0 0.0
      %975 = vmatpush1.msra.mxu0 %v870
      %976 = vmatprep.subr.mxu0 0.0
      %977 = vmatpush1.msra.mxu0 %v871
      %978 = vmatprep.subr.mxu0 0.0
      %979 = vmatpush1.msra.mxu0 %v872
      %980 = vmatprep.subr.mxu0 0.0
      %981 = vmatpush1.msra.mxu0 %v873
      %982 = vmatprep.subr.mxu0 0.0
      %983 = vmatpush1.msra.mxu0 %v874
      %984 = vmatprep.subr.mxu0 0.0
      %985 = vmatpush1.msra.mxu0 %v875
      %986 = vmatprep.subr.mxu0 0.0
      %987 = vmatpush1.msra.mxu0 %v876
      %988 = vmatprep.subr.mxu0 0.0
      %989 = vmatpush1.msra.mxu0 0.0
      %990 = vmatprep.subr.mxu0 0.0
      %991 = vmatpush1.msra.mxu0 0.0
      %992 = vmatprep.subr.mxu0 0.0
      %993 = vmatpush1.msra.mxu0 0.0
      %994 = vmatprep.subr.mxu0 0.0
      %995 = vmatpush1.msra.mxu0 0.0
      %996 = vmatprep.subr.mxu0 0.0
      %997 = vmatpush1.msra.mxu0 0.0
      %998 = vmatprep.subr.mxu0 0.0
      %999 = vmatpush1.msra.mxu0 0.0
      %1000 = vmatprep.subr.mxu0 0.0
      %1001 = vmatpush1.msra.mxu0 0.0
      %1002 = vmatprep.subr.mxu0 0.0
      %1003 = vmatpush1.msra.mxu0 0.0
      %1004 = vmatprep.subr.mxu0 0.0
      %1005 = vmatpush1.msra.mxu0 0.0
      %1006 = vmatprep.subr.mxu0 0.0
      %1007 = vmatpush1.msra.mxu0 0.0
      %1008 = vmatprep.subr.mxu0 0.0
      %1009 = vmatpush1.msra.mxu0 0.0
      %1010 = vmatprep.subr.mxu0 0.0
      %1011 = vmatpush1.msra.mxu0 0.0
      %1012 = vmatprep.subr.mxu0 0.0
      %1013 = vmatpush1.msra.mxu0 0.0
      %1014 = vmatprep.subr.mxu0 0.0
      %1015 = vmatpush1.msra.mxu0 0.0
      %1016 = vmatprep.subr.mxu0 0.0
      %1017 = vmatpush1.msra.mxu0 0.0
      %1018 = vmatprep.subr.mxu0 0.0
      %1019 = vmatpush1.msra.mxu0 0.0
      %1020 = vmatprep.subr.mxu0 0.0
      %1021 = vmatpush1.msra.mxu0 0.0
      %1022 = vmatprep.subr.mxu0 0.0
      %1023 = vmatpush1.msra.mxu0 0.0
      %1024 = vmatprep.subr.mxu0 0.0
      %1025 = vmatpush1.msra.mxu0 0.0
      %1026 = vmatprep.subr.mxu0 0.0
      %1027 = vmatpush1.msra.mxu0 0.0
      %1028 = vmatprep.subr.mxu0 0.0
      %1029 = vmatpush1.msra.mxu0 0.0
      %1030 = vmatprep.subr.mxu0 0.0
      %1031 = vmatpush1.msra.mxu0 0.0
      %1032 = vmatprep.subr.mxu0 0.0
      %1033 = vmatpush1.msra.mxu0 0.0
      %1034 = vmatprep.subr.mxu0 0.0
      %1035 = vmatpush1.msra.mxu0 0.0
      %1036 = vmatprep.mubr.f32.mxu0 0.0
      %1037 = vmatmul.mubr.f32.gmra.mrb[0].mxu0 %v967
      %v1038 = vpop.f32.mrb[0].mxu0
      %v1039 = vadd.f32 %v958, %v1038
      %v1040 = vpop.f32.mrb[0].mxu0
      %1041 = vmatprep.mubr.f32.mxu0 0.0
      %1042 = vmatmul.mubr.f32.gmra.mrb[0].mxu0 %v970
      %v1043 = vpop.f32.mrb[0].mxu0
      %v1044 = vadd.f32 %v963, %v1043
      %v1045 = vpop.f32.mrb[0].mxu0
      %1046 = vdwg.mxu0
      %v1047 = vld [vmem:[%s10] sm:$0xff]
      %v1048 = vld [vmem:[%s10 + $0x8] sm:$0xff]
      %v1049 = vld [vmem:[%s11] sm:$0x1]
      %v1051 = vlaneseq
      %v1052 = vshrl.u32 %v1051, 7
      %v1053 = vsub.s32 0, %v1052
      %v1054 = vrot.slane %v1049, %v1053
      %v1057 = vsel %vm783, %v1039, 0
      %v1060 = vsel %vm783, %v1044, 0
      %1062 = vmatprep.subr.mxu0 0.0
      %1063 = vmatpush1.msra.mxu0 %v1047
      %1064 = vmatprep.subr.mxu0 0.0
      %1065 = vmatpush1.msra.mxu0 %v1048
      %1066 = vmatprep.subr.mxu0 0.0
      %1067 = vmatpush1.msra.mxu0 0.0
      %1068 = vmatprep.subr.mxu0 0.0
      %1069 = vmatpush1.msra.mxu0 0.0
      %1070 = vmatprep.subr.mxu0 0.0
      %1071 = vmatpush1.msra.mxu0 0.0
      %1072 = vmatprep.subr.mxu0 0.0
      %1073 = vmatpush1.msra.mxu0 0.0
      %1074 = vmatprep.subr.mxu0 0.0
      %1075 = vmatpush1.msra.mxu0 0.0
      %1076 = vmatprep.subr.mxu0 0.0
      %1077 = vmatpush1.msra.mxu0 0.0
      %1078 = vmatprep.subr.mxu0 0.0
      %1079 = vmatpush1.msra.mxu0 0.0
      %1080 = vmatprep.subr.mxu0 0.0
      %1081 = vmatpush1.msra.mxu0 0.0
      %1082 = vmatprep.subr.mxu0 0.0
      %1083 = vmatpush1.msra.mxu0 0.0
      %1084 = vmatprep.subr.mxu0 0.0
      %1085 = vmatpush1.msra.mxu0 0.0
      %1086 = vmatprep.subr.mxu0 0.0
      %1087 = vmatpush1.msra.mxu0 0.0
      %1088 = vmatprep.subr.mxu0 0.0
      %1089 = vmatpush1.msra.mxu0 0.0
      %1090 = vmatprep.subr.mxu0 0.0
      %1091 = vmatpush1.msra.mxu0 0.0
      %1092 = vmatprep.subr.mxu0 0.0
      %1093 = vmatpush1.msra.mxu0 0.0
      %1094 = vmatprep.subr.mxu0 0.0
      %1095 = vmatpush1.msra.mxu0 0.0
      %1096 = vmatprep.subr.mxu0 0.0
      %1097 = vmatpush1.msra.mxu0 0.0
      %1098 = vmatprep.subr.mxu0 0.0
      %1099 = vmatpush1.msra.mxu0 0.0
      %1100 = vmatprep.subr.mxu0 0.0
      %1101 = vmatpush1.msra.mxu0 0.0
      %1102 = vmatprep.subr.mxu0 0.0
      %1103 = vmatpush1.msra.mxu0 0.0
      %1104 = vmatprep.subr.mxu0 0.0
      %1105 = vmatpush1.msra.mxu0 0.0
      %1106 = vmatprep.subr.mxu0 0.0
      %1107 = vmatpush1.msra.mxu0 0.0
      %1108 = vmatprep.subr.mxu0 0.0
      %1109 = vmatpush1.msra.mxu0 0.0
      %1110 = vmatprep.subr.mxu0 0.0
      %1111 = vmatpush1.msra.mxu0 0.0
      %1112 = vmatprep.subr.mxu0 0.0
      %1113 = vmatpush1.msra.mxu0 0.0
      %1114 = vmatprep.subr.mxu0 0.0
      %1115 = vmatpush1.msra.mxu0 0.0
      %1116 = vmatprep.subr.mxu0 0.0
      %1117 = vmatpush1.msra.mxu0 0.0
      %1118 = vmatprep.subr.mxu0 0.0
      %1119 = vmatpush1.msra.mxu0 0.0
      %1120 = vmatprep.subr.mxu0 0.0
      %1121 = vmatpush1.msra.mxu0 0.0
      %1122 = vmatprep.subr.mxu0 0.0
      %1123 = vmatpush1.msra.mxu0 0.0
      %1124 = vmatprep.subr.mxu0 0.0
      %1125 = vmatpush1.msra.mxu0 0.0
      %1126 = vmatprep.mubr.f32.mxu0 0.0
      %1127 = vmatmul.mubr.f32.gmra.mrb[0].mxu0 %v1057
      %v1128 = vpop.f32.mrb[0].mxu0
      %v1129 = vadd.f32 %v1054, %v1128
      %v1130 = vpop.f32.mrb[0].mxu0
      %1131 = vmatprep.mubr.f32.mxu0 0.0
      %1132 = vmatmul.mubr.f32.gmra.mrb[0].mxu0 %v1060
      %v1133 = vpop.f32.mrb[0].mxu0
      %v1134 = vadd.f32 %v1054, %v1133
      %v1135 = vpop.f32.mrb[0].mxu0
      %1136 = vdwg.mxu0
      %v1137 = vmax.f32 %v1129, 0.0
      %v1138 = vmax.f32 %v1134, 0.0
      %v1139 = vld [vmem:[%s502] sm:$0xff]
      %v1140 = vld [vmem:[%s502 + $0x8] sm:$0xff]
      %v1141 = vmul.f32 %v1139, %v1137
      %v1142 = vmul.f32 %v1140, %v1138
      %v1143 = vld [vmem:[%s12] sm:$0xff]
      %v1144 = vld [vmem:[%s12 + $0x8] sm:$0xff]
      %v1145 = vld [vmem:[%s12 + $0x10] sm:$0xff]
      %v1146 = vld [vmem:[%s12 + $0x18] sm:$0xff]
      %v1147 = vld [vmem:[%s12 + $0x20] sm:$0xff]
      %v1148 = vld [vmem:[%s12 + $0x28] sm:$0xff]
      %v1149 = vld [vmem:[%s12 + $0x30] sm:$0xff]
      %v1150 = vld [vmem:[%s12 + $0x38] sm:$0xff]
      %v1151 = vld [vmem:[%s12 + $0x40] sm:$0xff]
      %v1152 = vld [vmem:[%s12 + $0x48] sm:$0xff]
      %v1153 = vld [vmem:[%s12 + $0x50] sm:$0xff]
      %v1154 = vld [vmem:[%s12 + $0x58] sm:$0xff]
      %v1155 = vld [vmem:[%s12 + $0x60] sm:$0xff]
      %v1156 = vld [vmem:[%s12 + $0x68] sm:$0xff]
      %v1157 = vld [vmem:[%s12 + $0x70] sm:$0xff]
      %v1158 = vld [vmem:[%s12 + $0x78] sm:$0xff]
      %1159 = vmatprep.subr.mxu0 0.0
      %1160 = vmatpush1.msra.mxu0 %v1143
      %1161 = vmatprep.subr.mxu0 0.0
      %1162 = vmatpush1.msra.mxu0 %v1144
      %1163 = vmatprep.subr.mxu0 0.0
      %1164 = vmatpush1.msra.mxu0 %v1145
      %1165 = vmatprep.subr.mxu0 0.0
      %1166 = vmatpush1.msra.mxu0 %v1146
      %1167 = vmatprep.subr.mxu0 0.0
      %1168 = vmatpush1.msra.mxu0 %v1147
      %1169 = vmatprep.subr.mxu0 0.0
      %1170 = vmatpush1.msra.mxu0 %v1148
      %1171 = vmatprep.subr.mxu0 0.0
      %1172 = vmatpush1.msra.mxu0 %v1149
      %1173 = vmatprep.subr.mxu0 0.0
      %1174 = vmatpush1.msra.mxu0 %v1150
      %1175 = vmatprep.subr.mxu0 0.0
      %1176 = vmatpush1.msra.mxu0 %v1151
      %1177 = vmatprep.subr.mxu0 0.0
      %1178 = vmatpush1.msra.mxu0 %v1152
      %1179 = vmatprep.subr.mxu0 0.0
      %1180 = vmatpush1.msra.mxu0 %v1153
      %1181 = vmatprep.subr.mxu0 0.0
      %1182 = vmatpush1.msra.mxu0 %v1154
      %1183 = vmatprep.subr.mxu0 0.0
      %1184 = vmatpush1.msra.mxu0 %v1155
      %1185 = vmatprep.subr.mxu0 0.0
      %1186 = vmatpush1.msra.mxu0 %v1156
      %1187 = vmatprep.subr.mxu0 0.0
      %1188 = vmatpush1.msra.mxu0 %v1157
      %1189 = vmatprep.subr.mxu0 0.0
      %1190 = vmatpush1.msra.mxu0 %v1158
      %1191 = vmatprep.subr.mxu0 0.0
      %1192 = vmatpush1.msra.mxu0 0.0
      %1193 = vmatprep.subr.mxu0 0.0
      %1194 = vmatpush1.msra.mxu0 0.0
      %1195 = vmatprep.subr.mxu0 0.0
      %1196 = vmatpush1.msra.mxu0 0.0
      %1197 = vmatprep.subr.mxu0 0.0
      %1198 = vmatpush1.msra.mxu0 0.0
      %1199 = vmatprep.subr.mxu0 0.0
      %1200 = vmatpush1.msra.mxu0 0.0
      %1201 = vmatprep.subr.mxu0 0.0
      %1202 = vmatpush1.msra.mxu0 0.0
      %1203 = vmatprep.subr.mxu0 0.0
      %1204 = vmatpush1.msra.mxu0 0.0
      %1205 = vmatprep.subr.mxu0 0.0
      %1206 = vmatpush1.msra.mxu0 0.0
      %1207 = vmatprep.subr.mxu0 0.0
      %1208 = vmatpush1.msra.mxu0 0.0
      %1209 = vmatprep.subr.mxu0 0.0
      %1210 = vmatpush1.msra.mxu0 0.0
      %1211 = vmatprep.subr.mxu0 0.0
      %1212 = vmatpush1.msra.mxu0 0.0
      %1213 = vmatprep.subr.mxu0 0.0
      %1214 = vmatpush1.msra.mxu0 0.0
      %1215 = vmatprep.subr.mxu0 0.0
      %1216 = vmatpush1.msra.mxu0 0.0
      %1217 = vmatprep.subr.mxu0 0.0
      %1218 = vmatpush1.msra.mxu0 0.0
      %1219 = vmatprep.subr.mxu0 0.0
      %1220 = vmatpush1.msra.mxu0 0.0
      %1221 = vmatprep.subr.mxu0 0.0
      %1222 = vmatpush1.msra.mxu0 0.0
      %1223 = vmatprep.mubr.f32.mxu0 0.0
      %1224 = vmatmul.mubr.f32.gmra.mrb[0].mxu0 %v1141
      %v1225 = vpop.f32.mrb[0].mxu0
      %v1226 = vadd.f32 0.0, %v1225
      %v1227 = vpop.f32.mrb[0].mxu0
      %1228 = vmatprep.mubr.f32.mxu0 0.0
      %1229 = vmatmul.mubr.f32.gmra.mrb[0].mxu0 %v1142
      %v1230 = vpop.f32.mrb[0].mxu0
      %v1231 = vadd.f32 0.0, %v1230
      %v1232 = vpop.f32.mrb[0].mxu0
      %1233 = vdwg.mxu0
      %v1234 = vmax.f32 %v1226, 0.0
      %v1235 = vmax.f32 %v1231, 0.0
      %1236 = vst.msk [vmem:[%s508] sm:$0xff] %vm516, %v1234
      %1237 = vst.msk [vmem:[%s508 + $0x8] sm:$0xff] %vm516, %v1235
      %s1238 = smul.u32 2, %s24
      %p1239 = scmp.lt.s32.totalorder %s1238, 3
      %s1240 = scalar_select %p1239, %s1238, 3
      %s1241 = smul.addr %s1240, 8
      %s1242 = scalar_lea.vmem %s13, %s1241
      // Predicated region
      $region73: #{moe3_forward.1} parent=71 // pred_check
        %p1243 = pneg %p335
      $region74: #{moe3_forward.1} parent=71 // pred_check_branch
        %1245 = sbr.rel (%p1243) target = $region76
      $region75: #{moe3_forward.1} parent=71 // pred_region
        %s1246 = smul.u32 2, %s24
      $region76: #{moe3_forward.1} parent=71 // pred_fallthru
        _
    $region72: #{moe3_forward.1} parent=5 // pred_fallthru
      _
    %p1247 = scmp.le.s32.totalorder 2, %s19
    // Predicated region
    $region77: #{moe3_forward.1} parent=5 // pred_check
      %p1248 = pneg %p1247
    $region78: #{moe3_forward.1} parent=5 // pred_check_branch
      %1250 = sbr.rel (%p1248) target = $region80
    $region79: #{moe3_forward.1} parent=5 // pred_region
      %s1251 = ssub.s32 %s19, 2
      // Predicated region
      $region81: #{moe3_forward.1} parent=79 // pred_check
        %p1252 = pneg %p341
      $region82: #{moe3_forward.1} parent=79 // pred_check_branch
        %1254 = sbr.rel (%p1252) target = $region84
      $region83: #{moe3_forward.1} parent=79 // pred_region
        %s1255 = smul.u32 2, %s25
        %p1256 = scmp.lt.s32.totalorder %s1255, 3
        %s1257 = scalar_select %p1256, %s1255, 3
        %s1258 = smul.addr %s1257, 8
        %s1259 = scalar_lea.vmem %s13, %s1258
      $region84: #{moe3_forward.1} parent=79 // pred_fallthru
        _
    $region80: #{moe3_forward.1} parent=5 // pred_fallthru
      _
  $region6: #{moe3_forward.1} parent=0 // loop_footer
    %s23 = sadd.s32 1, %s19
  $region7: #{moe3_forward.1} parent=0 // loop_footer_branch
    %18 = sbr.rel target = $region3
  $region8: #{moe3_forward.1} parent=0 // loop_exit
    _

</llo_original>
